<compile_context>
chip_gen: v7x
topology: tpu7x:2x2x1
jax: 0.10.0
libtpu: 0.0.40
codegen_flags: <defaults>
</compile_context>

<pallas_src>
import math
from functools import lru_cache

import jax
import jax.numpy as jnp
from jax.experimental import pallas as pl
from jax.experimental.pallas import tpu as pltpu

EPS = 1e-5
C1, C2 = 4, 8          # lenett defaults
KSZ = 5
NC = 10                # opt.get('nc', 10)
LANE = 128


def _round_up(x, m):
    return (x + m - 1) // m * m


# ---------------------------- Pallas kernels ----------------------------

def _conv_bn_relu_kernel(col_ref, w_ref, cb_ref, g_ref, b_ref, o_ref):
    # col_ref: (M, Kp) bf16 im2col columns; w_ref: (Kp, Cp) bf16 weights;
    # cb/g/b: (1, Cp) f32 conv-bias / BN gamma / BN beta; o_ref: (M, Cp) f32.
    y = jnp.dot(col_ref[...], w_ref[...], preferred_element_type=jnp.float32)
    y = y + cb_ref[...]                                   # conv bias
    m = y.shape[0]
    # one-pass batch statistics (training-mode BN, biased variance)
    mean = jnp.sum(y, axis=0, keepdims=True) * (1.0 / m)
    ex2 = jnp.sum(y * y, axis=0, keepdims=True) * (1.0 / m)
    var = jnp.maximum(ex2 - mean * mean, 0.0)
    inv = jax.lax.rsqrt(var + EPS)
    o_ref[...] = jnp.maximum((y - mean) * inv * g_ref[...] + b_ref[...], 0.0)


@lru_cache(maxsize=None)
def _conv_bn_relu_call(M, Kp, Cp):
    return pl.pallas_call(
        _conv_bn_relu_kernel,
        grid=(1,),
        in_specs=[pl.BlockSpec((M, Kp), lambda i: (0, 0)),
                  pl.BlockSpec((Kp, Cp), lambda i: (0, 0)),
                  pl.BlockSpec((1, Cp), lambda i: (0, 0)),
                  pl.BlockSpec((1, Cp), lambda i: (0, 0)),
                  pl.BlockSpec((1, Cp), lambda i: (0, 0))],
        out_specs=pl.BlockSpec((M, Cp), lambda i: (0, 0)),
        out_shape=jax.ShapeDtypeStruct((M, Cp), jnp.float32),
        compiler_params=pltpu.CompilerParams(dimension_semantics=("arbitrary",)),
    )


def _linear_kernel(x_ref, w_ref, b_ref, o_ref):
    o_ref[...] = (jnp.dot(x_ref[...], w_ref[...], preferred_element_type=jnp.float32)
                  + b_ref[...])


@lru_cache(maxsize=None)
def _linear_call(Mp, Kp, Np):
    return pl.pallas_call(
        _linear_kernel,
        grid=(1,),
        in_specs=[pl.BlockSpec((Mp, Kp), lambda i: (0, 0)),
                  pl.BlockSpec((Kp, Np), lambda i: (0, 0)),
                  pl.BlockSpec((1, Np), lambda i: (0, 0))],
        out_specs=pl.BlockSpec((Mp, Np), lambda i: (0, 0)),
        out_shape=jax.ShapeDtypeStruct((Mp, Np), jnp.float32),
        compiler_params=pltpu.CompilerParams(dimension_semantics=("arbitrary",)),
    )


# ---------------------------- glue (fused by XLA inside the single jit) ----------------------------

def _im2col(x, k):
    """x: (N, H, W, Cin) -> (N*oh*ow, Cin*k*k) columns, (cin, kh, kw) ordering
    matching PyTorch's Conv2d weight flattening. Valid conv, stride 1."""
    N, H, W, Cin = x.shape
    oh, ow = H - k + 1, W - k + 1
    pats = [x[:, i:i + oh, j:j + ow, :] for i in range(k) for j in range(k)]
    col = jnp.stack(pats, axis=-1)                      # (N, oh, ow, Cin, k*k)
    return col.reshape(N * oh * ow, Cin * k * k), (N, oh, ow)


def _maxpool(x, k):
    """MaxPool2d(k, stride=k) on NHWC (spatial dims divisible by k here)."""
    N, H, W, C = x.shape
    return x.reshape(N, H // k, k, W // k, k, C).max(axis=(2, 4))


def _conv_bn_relu(x, wp, cbp, gp, bp, k, cout):
    """Conv2d(k, valid, stride 1, bias) + train-mode BN + ReLU, fused in one Pallas kernel."""
    col, (N, oh, ow) = _im2col(x, k)
    M, Kreal = col.shape
    Kp, Cp = wp.shape
    assert M % 16 == 0, "row count must satisfy bf16 sublane tiling (always true for lenett)"
    col = jnp.pad(col, ((0, 0), (0, Kp - Kreal))).astype(jnp.bfloat16)
    y = _conv_bn_relu_call(M, Kp, Cp)(col, wp, cbp, gp, bp)
    return y[:, :cout].reshape(N, oh, ow, cout)


# ---------------------------- parameters (PyTorch default inits, pre-padded once) ----------------------------

def init_params(key):
    ks = jax.random.split(key, 6)

    def unif(k, shape, bound):
        return jax.random.uniform(k, shape, jnp.float32, -bound, bound)

    fan1 = 1 * KSZ * KSZ
    fan2 = C1 * KSZ * KSZ
    fan_fc = C2 * 2 * 2
    w1 = unif(ks[0], (C1, 1, KSZ, KSZ), 1.0 / math.sqrt(fan1))     # Conv2d default init
    cb1 = unif(ks[1], (C1,), 1.0 / math.sqrt(fan1))
    w2 = unif(ks[2], (C2, C1, KSZ, KSZ), 1.0 / math.sqrt(fan2))
    cb2 = unif(ks[3], (C2,), 1.0 / math.sqrt(fan2))
    fcw = unif(ks[4], (NC, fan_fc), 1.0 / math.sqrt(fan_fc))        # Linear default init
    fcb = unif(ks[5], (NC,), 1.0 / math.sqrt(fan_fc))

    def conv_w_mat(w):  # (Cout, Cin, kh, kw) -> (Kp, Cp) bf16, matmul-ready, padded once
        cout, cin, kh, kw = w.shape
        K = cin * kh * kw
        wm = jnp.transpose(w.reshape(cout, K))          # (K, Cout), cin-major then kh,kw
        Kp, Cp = _round_up(K, LANE), _round_up(cout, LANE)
        return jnp.pad(wm, ((0, Kp - K), (0, Cp - cout))).astype(jnp.bfloat16)

    def chan_pad(v, cp):  # (C,) -> (1, Cp) f32 (padded region is zero)
        return jnp.pad(v, (0, cp - v.shape[0])).reshape(1, cp)

    c1p, c2p = _round_up(C1, LANE), _round_up(C2, LANE)
    kfc, nfc = _round_up(fan_fc, LANE), _round_up(NC, LANE)
    return {
        'w1': conv_w_mat(w1), 'cb1': chan_pad(cb1, c1p),
        'g1': chan_pad(jnp.ones((C1,), jnp.float32), c1p),
        'b1': chan_pad(jnp.zeros((C1,), jnp.float32), c1p),
        'w2': conv_w_mat(w2), 'cb2': chan_pad(cb2, c2p),
        'g2': chan_pad(jnp.ones((C2,), jnp.float32), c2p),
        'b2': chan_pad(jnp.zeros((C2,), jnp.float32), c2p),
        'fcw': jnp.pad(jnp.transpose(fcw), ((0, kfc - fan_fc), (0, nfc - NC))),  # (128,128) f32
        'fcb': jnp.pad(fcb, (0, nfc - NC)).reshape(1, nfc),
    }


# ---------------------------- forward (single jit over the whole graph) ----------------------------

def lenett_forward(params, x_nchw):
    x = jnp.transpose(x_nchw.astype(jnp.float32), (0, 2, 3, 1))    # NCHW -> NHWC, (N,28,28,1)

    # convbn block 1: Conv(1,4,5)+bias+BN+ReLU (fused Pallas) -> MaxPool(3,3) -> Dropout(0)=id
    x = _conv_bn_relu(x, params['w1'], params['cb1'], params['g1'], params['b1'], KSZ, C1)
    x = _maxpool(x, 3)                                             # (N, 8, 8, 4)

    # convbn block 2: Conv(4,8,5)+bias+BN+ReLU (fused Pallas) -> MaxPool(2,2) -> Dropout(0)=id
    x = _conv_bn_relu(x, params['w2'], params['cb2'], params['g2'], params['b2'], KSZ, C2)
    x = _maxpool(x, 2)                                             # (N, 2, 2, 8)

    # View(c2*2*2): PyTorch flattens NCHW (channel-major) order
    N = x.shape[0]
    feat = jnp.transpose(x, (0, 3, 1, 2)).reshape(N, C2 * 2 * 2)   # (N, 32)

    # Linear(32, 10) with bias — fused matmul + bias Pallas kernel
    Kp, Np = params['fcw'].shape
    Mp = _round_up(N, 8)
    featp = jnp.pad(feat, ((0, Mp - N), (0, Kp - feat.shape[1])))
    logits = _linear_call(Mp, Kp, Np)(featp, params['fcw'], params['fcb'])
    return logits[:N, :NC]


lenett_forward_jit = jax.jit(lenett_forward)


if __name__ == "__main__":
    key = jax.random.PRNGKey(0)
    pkey, xkey = jax.random.split(key)
    params = init_params(pkey)
    # lenett requires 1-channel 28x28 inputs (MNIST-like): View(c2*2*2) only matches that size.
    x = jax.random.normal(xkey, (2, 1, 28, 28), jnp.float32)       # NCHW like PyTorch
    logits = lenett_forward_jit(params, x)
    logits = jax.block_until_ready(logits)
    assert logits.shape == (2, NC), logits.shape
    assert bool(jnp.all(jnp.isfinite(logits)))
    print("KERNEL_OK")
</pallas_src>

<mosaic_0001>
module attributes {stable_mosaic.version = 11 : i64} {
  func.func @_conv_bn_relu_kernel(%arg0: i32, %arg1: memref<1152x128xbf16, #tpu.memory_space<vmem>>, %arg2: memref<128x128xbf16, #tpu.memory_space<vmem>>, %arg3: memref<1x128xf32, #tpu.memory_space<vmem>>, %arg4: memref<1x128xf32, #tpu.memory_space<vmem>>, %arg5: memref<1x128xf32, #tpu.memory_space<vmem>>, %arg6: memref<1152x128xf32, #tpu.memory_space<vmem>>) attributes {dimension_semantics = [#tpu.dimension_semantics<arbitrary>], iteration_bounds = array<i64: 1>, scalar_prefetch = 0 : i64, scratch_operands = 0 : i64, tpu.core_type = #tpu.core_type<tc>, window_params = [{pipeline_mode = #tpu.pipeline_mode<synchronous>, transform_indices = @transform_0, window_bounds = array<i64: 1152, 128>}, {pipeline_mode = #tpu.pipeline_mode<synchronous>, transform_indices = @transform_1, window_bounds = array<i64: 128, 128>}, {pipeline_mode = #tpu.pipeline_mode<synchronous>, transform_indices = @transform_2, window_bounds = array<i64: 1, 128>}, {pipeline_mode = #tpu.pipeline_mode<synchronous>, transform_indices = @transform_3, window_bounds = array<i64: 1, 128>}, {pipeline_mode = #tpu.pipeline_mode<synchronous>, transform_indices = @transform_4, window_bounds = array<i64: 1, 128>}, {pipeline_mode = #tpu.pipeline_mode<synchronous>, transform_indices = @transform_5, window_bounds = array<i64: 1152, 128>}]} {
    %c0 = arith.constant 0 : index
    %c0_0 = arith.constant 0 : index
    %0 = vector.load %arg1[%c0, %c0_0] : memref<1152x128xbf16, #tpu.memory_space<vmem>>, vector<1152x128xbf16>
    %c0_1 = arith.constant 0 : index
    %c0_2 = arith.constant 0 : index
    %1 = vector.load %arg2[%c0_1, %c0_2] : memref<128x128xbf16, #tpu.memory_space<vmem>>, vector<128x128xbf16>
    %cst = arith.constant dense<0.000000e+00> : vector<1152x128xf32>
    %2 = tpu.matmul %0, %1, %cst {dimension_numbers = #tpu.dot_dimension_numbers<[1], [0], [0], [1], [0, 0, 1, 1], [], []>} : vector<1152x128xbf16>, vector<128x128xbf16>, vector<1152x128xf32> -> vector<1152x128xf32>
    %c0_3 = arith.constant 0 : index
    %c0_4 = arith.constant 0 : index
    %3 = vector.load %arg3[%c0_3, %c0_4] : memref<1x128xf32, #tpu.memory_space<vmem>>, vector<1x128xf32>
    %4 = vector.broadcast %3 : vector<1x128xf32> to vector<1152x128xf32>
    %5 = arith.addf %2, %4 : vector<1152x128xf32>
    %cst_5 = arith.constant dense<0.000000e+00> : vector<128xf32>
    %6 = vector.multi_reduction <add>, %5, %cst_5 [0] : vector<1152x128xf32> to vector<128xf32>
    %7 = vector.shape_cast %6 : vector<128xf32> to vector<1x128xf32>
    %cst_6 = arith.constant 8.68055562E-4 : f32
    %8 = vector.broadcast %cst_6 : f32 to vector<1x128xf32>
    %9 = arith.mulf %7, %8 : vector<1x128xf32>
    %10 = arith.mulf %5, %5 : vector<1152x128xf32>
    %cst_7 = arith.constant dense<0.000000e+00> : vector<128xf32>
    %11 = vector.multi_reduction <add>, %10, %cst_7 [0] : vector<1152x128xf32> to vector<128xf32>
    %12 = vector.shape_cast %11 : vector<128xf32> to vector<1x128xf32>
    %cst_8 = arith.constant 8.68055562E-4 : f32
    %13 = vector.broadcast %cst_8 : f32 to vector<1x128xf32>
    %14 = arith.mulf %12, %13 : vector<1x128xf32>
    %15 = arith.mulf %9, %9 : vector<1x128xf32>
    %16 = arith.subf %14, %15 : vector<1x128xf32>
    %cst_9 = arith.constant 0.000000e+00 : f32
    %17 = vector.broadcast %cst_9 : f32 to vector<1x128xf32>
    %18 = arith.maximumf %16, %17 : vector<1x128xf32>
    %cst_10 = arith.constant 9.99999974E-6 : f32
    %19 = vector.broadcast %cst_10 : f32 to vector<1x128xf32>
    %20 = arith.addf %18, %19 : vector<1x128xf32>
    %21 = math.rsqrt %20 : vector<1x128xf32>
    %22 = vector.broadcast %9 : vector<1x128xf32> to vector<1152x128xf32>
    %23 = arith.subf %5, %22 : vector<1152x128xf32>
    %24 = vector.broadcast %21 : vector<1x128xf32> to vector<1152x128xf32>
    %25 = arith.mulf %23, %24 : vector<1152x128xf32>
    %c0_11 = arith.constant 0 : index
    %c0_12 = arith.constant 0 : index
    %26 = vector.load %arg4[%c0_11, %c0_12] : memref<1x128xf32, #tpu.memory_space<vmem>>, vector<1x128xf32>
    %27 = vector.broadcast %26 : vector<1x128xf32> to vector<1152x128xf32>
    %28 = arith.mulf %25, %27 : vector<1152x128xf32>
    %c0_13 = arith.constant 0 : index
    %c0_14 = arith.constant 0 : index
    %29 = vector.load %arg5[%c0_13, %c0_14] : memref<1x128xf32, #tpu.memory_space<vmem>>, vector<1x128xf32>
    %30 = vector.broadcast %29 : vector<1x128xf32> to vector<1152x128xf32>
    %31 = arith.addf %28, %30 : vector<1152x128xf32>
    %cst_15 = arith.constant 0.000000e+00 : f32
    %32 = vector.broadcast %cst_15 : f32 to vector<1152x128xf32>
    %33 = arith.maximumf %31, %32 : vector<1152x128xf32>
    %c0_16 = arith.constant 0 : index
    %c0_17 = arith.constant 0 : index
    %34 = vector.load %arg6[%c0_16, %c0_17] : memref<1152x128xf32, #tpu.memory_space<vmem>>, vector<1152x128xf32>
    tpu.vector_store %arg6[%c0_16, %c0_17], %33 {strides = array<i32>} : memref<1152x128xf32, #tpu.memory_space<vmem>>, vector<1152x128xf32>,
    return
  }
  func.func @transform_0(%arg0: i32) -> (i32, i32) {
    %c0_i32 = arith.constant 0 : i32
    %c0_i32_0 = arith.constant 0 : i32
    %c0_i32_1 = arith.constant 0 : i32
    return %c0_i32, %c0_i32_0 : i32, i32
  }
  func.func @transform_1(%arg0: i32) -> (i32, i32) {
    %c0_i32 = arith.constant 0 : i32
    %c0_i32_0 = arith.constant 0 : i32
    %c0_i32_1 = arith.constant 0 : i32
    return %c0_i32, %c0_i32_0 : i32, i32
  }
  func.func @transform_2(%arg0: i32) -> (i32, i32) {
    %c0_i32 = arith.constant 0 : i32
    %c0_i32_0 = arith.constant 0 : i32
    %c0_i32_1 = arith.constant 0 : i32
    return %c0_i32, %c0_i32_0 : i32, i32
  }
  func.func @transform_3(%arg0: i32) -> (i32, i32) {
    %c0_i32 = arith.constant 0 : i32
    %c0_i32_0 = arith.constant 0 : i32
    %c0_i32_1 = arith.constant 0 : i32
    return %c0_i32, %c0_i32_0 : i32, i32
  }
  func.func @transform_4(%arg0: i32) -> (i32, i32) {
    %c0_i32 = arith.constant 0 : i32
    %c0_i32_0 = arith.constant 0 : i32
    %c0_i32_1 = arith.constant 0 : i32
    return %c0_i32, %c0_i32_0 : i32, i32
  }
  func.func @transform_5(%arg0: i32) -> (i32, i32) {
    %c0_i32 = arith.constant 0 : i32
    %c0_i32_0 = arith.constant 0 : i32
    %c0_i32_1 = arith.constant 0 : i32
    return %c0_i32, %c0_i32_0 : i32, i32
  }
}

module attributes {stable_mosaic.version = 11 : i64} {
  func.func @_conv_bn_relu_kernel(%arg0: i32, %arg1: memref<32x128xbf16, #tpu.memory_space<vmem>>, %arg2: memref<128x128xbf16, #tpu.memory_space<vmem>>, %arg3: memref<1x128xf32, #tpu.memory_space<vmem>>, %arg4: memref<1x128xf32, #tpu.memory_space<vmem>>, %arg5: memref<1x128xf32, #tpu.memory_space<vmem>>, %arg6: memref<32x128xf32, #tpu.memory_space<vmem>>) attributes {dimension_semantics = [#tpu.dimension_semantics<arbitrary>], iteration_bounds = array<i64: 1>, scalar_prefetch = 0 : i64, scratch_operands = 0 : i64, tpu.core_type = #tpu.core_type<tc>, window_params = [{pipeline_mode = #tpu.pipeline_mode<synchronous>, transform_indices = @transform_0, window_bounds = array<i64: 32, 128>}, {pipeline_mode = #tpu.pipeline_mode<synchronous>, transform_indices = @transform_1, window_bounds = array<i64: 128, 128>}, {pipeline_mode = #tpu.pipeline_mode<synchronous>, transform_indices = @transform_2, window_bounds = array<i64: 1, 128>}, {pipeline_mode = #tpu.pipeline_mode<synchronous>, transform_indices = @transform_3, window_bounds = array<i64: 1, 128>}, {pipeline_mode = #tpu.pipeline_mode<synchronous>, transform_indices = @transform_4, window_bounds = array<i64: 1, 128>}, {pipeline_mode = #tpu.pipeline_mode<synchronous>, transform_indices = @transform_5, window_bounds = array<i64: 32, 128>}]} {
    %c0 = arith.constant 0 : index
    %c0_0 = arith.constant 0 : index
    %0 = vector.load %arg1[%c0, %c0_0] : memref<32x128xbf16, #tpu.memory_space<vmem>>, vector<32x128xbf16>
    %c0_1 = arith.constant 0 : index
    %c0_2 = arith.constant 0 : index
    %1 = vector.load %arg2[%c0_1, %c0_2] : memref<128x128xbf16, #tpu.memory_space<vmem>>, vector<128x128xbf16>
    %cst = arith.constant dense<0.000000e+00> : vector<32x128xf32>
    %2 = tpu.matmul %0, %1, %cst {dimension_numbers = #tpu.dot_dimension_numbers<[1], [0], [0], [1], [0, 0, 1, 1], [], []>} : vector<32x128xbf16>, vector<128x128xbf16>, vector<32x128xf32> -> vector<32x128xf32>
    %c0_3 = arith.constant 0 : index
    %c0_4 = arith.constant 0 : index
    %3 = vector.load %arg3[%c0_3, %c0_4] : memref<1x128xf32, #tpu.memory_space<vmem>>, vector<1x128xf32>
    %4 = vector.broadcast %3 : vector<1x128xf32> to vector<32x128xf32>
    %5 = arith.addf %2, %4 : vector<32x128xf32>
    %cst_5 = arith.constant dense<0.000000e+00> : vector<128xf32>
    %6 = vector.multi_reduction <add>, %5, %cst_5 [0] : vector<32x128xf32> to vector<128xf32>
    %7 = vector.shape_cast %6 : vector<128xf32> to vector<1x128xf32>
    %cst_6 = arith.constant 3.125000e-02 : f32
    %8 = vector.broadcast %cst_6 : f32 to vector<1x128xf32>
    %9 = arith.mulf %7, %8 : vector<1x128xf32>
    %10 = arith.mulf %5, %5 : vector<32x128xf32>
    %cst_7 = arith.constant dense<0.000000e+00> : vector<128xf32>
    %11 = vector.multi_reduction <add>, %10, %cst_7 [0] : vector<32x128xf32> to vector<128xf32>
    %12 = vector.shape_cast %11 : vector<128xf32> to vector<1x128xf32>
    %cst_8 = arith.constant 3.125000e-02 : f32
    %13 = vector.broadcast %cst_8 : f32 to vector<1x128xf32>
    %14 = arith.mulf %12, %13 : vector<1x128xf32>
    %15 = arith.mulf %9, %9 : vector<1x128xf32>
    %16 = arith.subf %14, %15 : vector<1x128xf32>
    %cst_9 = arith.constant 0.000000e+00 : f32
    %17 = vector.broadcast %cst_9 : f32 to vector<1x128xf32>
    %18 = arith.maximumf %16, %17 : vector<1x128xf32>
    %cst_10 = arith.constant 9.99999974E-6 : f32
    %19 = vector.broadcast %cst_10 : f32 to vector<1x128xf32>
    %20 = arith.addf %18, %19 : vector<1x128xf32>
    %21 = math.rsqrt %20 : vector<1x128xf32>
    %22 = vector.broadcast %9 : vector<1x128xf32> to vector<32x128xf32>
    %23 = arith.subf %5, %22 : vector<32x128xf32>
    %24 = vector.broadcast %21 : vector<1x128xf32> to vector<32x128xf32>
    %25 = arith.mulf %23, %24 : vector<32x128xf32>
    %c0_11 = arith.constant 0 : index
    %c0_12 = arith.constant 0 : index
    %26 = vector.load %arg4[%c0_11, %c0_12] : memref<1x128xf32, #tpu.memory_space<vmem>>, vector<1x128xf32>
    %27 = vector.broadcast %26 : vector<1x128xf32> to vector<32x128xf32>
    %28 = arith.mulf %25, %27 : vector<32x128xf32>
    %c0_13 = arith.constant 0 : index
    %c0_14 = arith.constant 0 : index
    %29 = vector.load %arg5[%c0_13, %c0_14] : memref<1x128xf32, #tpu.memory_space<vmem>>, vector<1x128xf32>
    %30 = vector.broadcast %29 : vector<1x128xf32> to vector<32x128xf32>
    %31 = arith.addf %28, %30 : vector<32x128xf32>
    %cst_15 = arith.constant 0.000000e+00 : f32
    %32 = vector.broadcast %cst_15 : f32 to vector<32x128xf32>
    %33 = arith.maximumf %31, %32 : vector<32x128xf32>
    %c0_16 = arith.constant 0 : index
    %c0_17 = arith.constant 0 : index
    %34 = vector.load %arg6[%c0_16, %c0_17] : memref<32x128xf32, #tpu.memory_space<vmem>>, vector<32x128xf32>
    tpu.vector_store %arg6[%c0_16, %c0_17], %33 {strides = array<i32>} : memref<32x128xf32, #tpu.memory_space<vmem>>, vector<32x128xf32>,
    return
  }
  func.func @transform_0(%arg0: i32) -> (i32, i32) {
    %c0_i32 = arith.constant 0 : i32
    %c0_i32_0 = arith.constant 0 : i32
    %c0_i32_1 = arith.constant 0 : i32
    return %c0_i32, %c0_i32_0 : i32, i32
  }
  func.func @transform_1(%arg0: i32) -> (i32, i32) {
    %c0_i32 = arith.constant 0 : i32
    %c0_i32_0 = arith.constant 0 : i32
    %c0_i32_1 = arith.constant 0 : i32
    return %c0_i32, %c0_i32_0 : i32, i32
  }
  func.func @transform_2(%arg0: i32) -> (i32, i32) {
    %c0_i32 = arith.constant 0 : i32
    %c0_i32_0 = arith.constant 0 : i32
    %c0_i32_1 = arith.constant 0 : i32
    return %c0_i32, %c0_i32_0 : i32, i32
  }
  func.func @transform_3(%arg0: i32) -> (i32, i32) {
    %c0_i32 = arith.constant 0 : i32
    %c0_i32_0 = arith.constant 0 : i32
    %c0_i32_1 = arith.constant 0 : i32
    return %c0_i32, %c0_i32_0 : i32, i32
  }
  func.func @transform_4(%arg0: i32) -> (i32, i32) {
    %c0_i32 = arith.constant 0 : i32
    %c0_i32_0 = arith.constant 0 : i32
    %c0_i32_1 = arith.constant 0 : i32
    return %c0_i32, %c0_i32_0 : i32, i32
  }
  func.func @transform_5(%arg0: i32) -> (i32, i32) {
    %c0_i32 = arith.constant 0 : i32
    %c0_i32_0 = arith.constant 0 : i32
    %c0_i32_1 = arith.constant 0 : i32
    return %c0_i32, %c0_i32_0 : i32, i32
  }
}

module attributes {stable_mosaic.version = 11 : i64} {
  func.func @_linear_kernel(%arg0: i32, %arg1: memref<8x128xf32, #tpu.memory_space<vmem>>, %arg2: memref<128x128xf32, #tpu.memory_space<vmem>>, %arg3: memref<1x128xf32, #tpu.memory_space<vmem>>, %arg4: memref<8x128xf32, #tpu.memory_space<vmem>>) attributes {dimension_semantics = [#tpu.dimension_semantics<arbitrary>], iteration_bounds = array<i64: 1>, scalar_prefetch = 0 : i64, scratch_operands = 0 : i64, tpu.core_type = #tpu.core_type<tc>, window_params = [{pipeline_mode = #tpu.pipeline_mode<synchronous>, transform_indices = @transform_0, window_bounds = array<i64: 8, 128>}, {pipeline_mode = #tpu.pipeline_mode<synchronous>, transform_indices = @transform_1, window_bounds = array<i64: 128, 128>}, {pipeline_mode = #tpu.pipeline_mode<synchronous>, transform_indices = @transform_2, window_bounds = array<i64: 1, 128>}, {pipeline_mode = #tpu.pipeline_mode<synchronous>, transform_indices = @transform_3, window_bounds = array<i64: 8, 128>}]} {
    %c0 = arith.constant 0 : index
    %c0_0 = arith.constant 0 : index
    %0 = vector.load %arg1[%c0, %c0_0] : memref<8x128xf32, #tpu.memory_space<vmem>>, vector<8x128xf32>
    %c0_1 = arith.constant 0 : index
    %c0_2 = arith.constant 0 : index
    %1 = vector.load %arg2[%c0_1, %c0_2] : memref<128x128xf32, #tpu.memory_space<vmem>>, vector<128x128xf32>
    %cst = arith.constant dense<0.000000e+00> : vector<8x128xf32>
    %2 = tpu.matmul %0, %1, %cst {dimension_numbers = #tpu.dot_dimension_numbers<[1], [0], [0], [1], [0, 0, 1, 1], [], []>} : vector<8x128xf32>, vector<128x128xf32>, vector<8x128xf32> -> vector<8x128xf32>
    %c0_3 = arith.constant 0 : index
    %c0_4 = arith.constant 0 : index
    %3 = vector.load %arg3[%c0_3, %c0_4] : memref<1x128xf32, #tpu.memory_space<vmem>>, vector<1x128xf32>
    %4 = vector.broadcast %3 : vector<1x128xf32> to vector<8x128xf32>
    %5 = arith.addf %2, %4 : vector<8x128xf32>
    %c0_5 = arith.constant 0 : index
    %c0_6 = arith.constant 0 : index
    %6 = vector.load %arg4[%c0_5, %c0_6] : memref<8x128xf32, #tpu.memory_space<vmem>>, vector<8x128xf32>
    tpu.vector_store %arg4[%c0_5, %c0_6], %5 {strides = array<i32>} : memref<8x128xf32, #tpu.memory_space<vmem>>, vector<8x128xf32>,
    return
  }
  func.func @transform_0(%arg0: i32) -> (i32, i32) {
    %c0_i32 = arith.constant 0 : i32
    %c0_i32_0 = arith.constant 0 : i32
    %c0_i32_1 = arith.constant 0 : i32
    return %c0_i32, %c0_i32_0 : i32, i32
  }
  func.func @transform_1(%arg0: i32) -> (i32, i32) {
    %c0_i32 = arith.constant 0 : i32
    %c0_i32_0 = arith.constant 0 : i32
    %c0_i32_1 = arith.constant 0 : i32
    return %c0_i32, %c0_i32_0 : i32, i32
  }
  func.func @transform_2(%arg0: i32) -> (i32, i32) {
    %c0_i32 = arith.constant 0 : i32
    %c0_i32_0 = arith.constant 0 : i32
    %c0_i32_1 = arith.constant 0 : i32
    return %c0_i32, %c0_i32_0 : i32, i32
  }
  func.func @transform_3(%arg0: i32) -> (i32, i32) {
    %c0_i32 = arith.constant 0 : i32
    %c0_i32_0 = arith.constant 0 : i32
    %c0_i32_1 = arith.constant 0 : i32
    return %c0_i32, %c0_i32_0 : i32, i32
  }
}

</mosaic_0001>

<llo_original>
// kernel: lenett_forward.3
$region0: #{lenett_forward.3}
  #allocation0 [shape = 'u32[]', space=smem, size = 0x4, offset = 0x4, fixed_abs, tag = 'smem constant byte address 0x4 - core index']
  #allocation1 [shape = 'u32[144,128]{1,0:T(1,128)}', space=vmem, size = 0x12000, scoped, tag = 'internal scratch']
  %s0 = inlined_call_operand.vmem [shape: bf16[1152,128], index: 0, kind: input, shape index: {}]
  %s1 = inlined_call_operand.vmem [shape: bf16[128,128], index: 1, kind: input, shape index: {}]
  %s2 = inlined_call_operand.vmem [shape: f32[1,128], index: 2, kind: input, shape index: {}]
  %s3 = inlined_call_operand.vmem [shape: f32[1,128], index: 3, kind: input, shape index: {}]
  %s4 = inlined_call_operand.vmem [shape: f32[1,128], index: 4, kind: input, shape index: {}]
  %s5 = inlined_call_operand.vmem [shape: f32[1152,128], index: 5, kind: output, shape index: {}]
  %s6 = sld [smem:[#allocation0]]
  $region30: #{lenett_forward.3} parent=0
    _
  %s8 = ssub.s32 1, %s6
  %s9 = scalar_select 0, %s8, %s6
  // Predicated region
  $region2: #{lenett_forward.3} parent=0 // pred_check
    _
  $region3: #{lenett_forward.3} parent=0 // pred_check_branch
    %11 = sbr.rel (0) target = $region5
  $region4: #{lenett_forward.3} parent=0 // pred_region
    _
  $region5: #{lenett_forward.3} parent=0 // pred_fallthru
    _
  // Predicated region
  $region6: #{lenett_forward.3} parent=0 // pred_check
    _
  $region7: #{lenett_forward.3} parent=0 // pred_check_branch
    %13 = sbr.rel (0) target = $region9
  $region8: #{lenett_forward.3} parent=0 // pred_region
    _
  $region9: #{lenett_forward.3} parent=0 // pred_fallthru
    _
  // Predicated region
  $region10: #{lenett_forward.3} parent=0 // pred_check
    _
  $region11: #{lenett_forward.3} parent=0 // pred_check_branch
    %15 = sbr.rel (0) target = $region13
  $region12: #{lenett_forward.3} parent=0 // pred_region
    _
  $region13: #{lenett_forward.3} parent=0 // pred_fallthru
    _
  // Predicated region
  $region14: #{lenett_forward.3} parent=0 // pred_check
    _
  $region15: #{lenett_forward.3} parent=0 // pred_check_branch
    %17 = sbr.rel (0) target = $region17
  $region16: #{lenett_forward.3} parent=0 // pred_region
    _
  $region17: #{lenett_forward.3} parent=0 // pred_fallthru
    _
  // Predicated region
  $region18: #{lenett_forward.3} parent=0 // pred_check
    _
  $region19: #{lenett_forward.3} parent=0 // pred_check_branch
    %19 = sbr.rel (0) target = $region21
  $region20: #{lenett_forward.3} parent=0 // pred_region
    _
  $region21: #{lenett_forward.3} parent=0 // pred_fallthru
    _
  %v21 = vld [vmem:[%s0] sm:$0xf]
  %v22 = vld [vmem:[%s0 + $0x4] sm:$0xf]
  %v23 = vld [vmem:[%s0 + $0x8] sm:$0xf]
  %v24 = vld [vmem:[%s0 + $0xc] sm:$0xf]
  %v25 = vld [vmem:[%s0 + $0x10] sm:$0xf]
  %v26 = vld [vmem:[%s0 + $0x14] sm:$0xf]
  %v27 = vld [vmem:[%s0 + $0x18] sm:$0xf]
  %v28 = vld [vmem:[%s0 + $0x1c] sm:$0xf]
  %v29 = vld [vmem:[%s0 + $0x20] sm:$0xf]
  %v30 = vld [vmem:[%s0 + $0x24] sm:$0xf]
  %v31 = vld [vmem:[%s0 + $0x28] sm:$0xf]
  %v32 = vld [vmem:[%s0 + $0x2c] sm:$0xf]
  %v33 = vld [vmem:[%s0 + $0x30] sm:$0xf]
  %v34 = vld [vmem:[%s0 + $0x34] sm:$0xf]
  %v35 = vld [vmem:[%s0 + $0x38] sm:$0xf]
  %v36 = vld [vmem:[%s0 + $0x3c] sm:$0xf]
  %v37 = vld [vmem:[%s0 + $0x40] sm:$0xf]
  %v38 = vld [vmem:[%s0 + $0x44] sm:$0xf]
  %v39 = vld [vmem:[%s0 + $0x48] sm:$0xf]
  %v40 = vld [vmem:[%s0 + $0x4c] sm:$0xf]
  %v41 = vld [vmem:[%s0 + $0x50] sm:$0xf]
  %v42 = vld [vmem:[%s0 + $0x54] sm:$0xf]
  %v43 = vld [vmem:[%s0 + $0x58] sm:$0xf]
  %v44 = vld [vmem:[%s0 + $0x5c] sm:$0xf]
  %v45 = vld [vmem:[%s0 + $0x60] sm:$0xf]
  %v46 = vld [vmem:[%s0 + $0x64] sm:$0xf]
  %v47 = vld [vmem:[%s0 + $0x68] sm:$0xf]
  %v48 = vld [vmem:[%s0 + $0x6c] sm:$0xf]
  %v49 = vld [vmem:[%s0 + $0x70] sm:$0xf]
  %v50 = vld [vmem:[%s0 + $0x74] sm:$0xf]
  %v51 = vld [vmem:[%s0 + $0x78] sm:$0xf]
  %v52 = vld [vmem:[%s0 + $0x7c] sm:$0xf]
  %v53 = vld [vmem:[%s0 + $0x80] sm:$0xf]
  %v54 = vld [vmem:[%s0 + $0x84] sm:$0xf]
  %v55 = vld [vmem:[%s0 + $0x88] sm:$0xf]
  %v56 = vld [vmem:[%s0 + $0x8c] sm:$0xf]
  %v57 = vld [vmem:[%s0 + $0x90] sm:$0xf]
  %v58 = vld [vmem:[%s0 + $0x94] sm:$0xf]
  %v59 = vld [vmem:[%s0 + $0x98] sm:$0xf]
  %v60 = vld [vmem:[%s0 + $0x9c] sm:$0xf]
  %v61 = vld [vmem:[%s0 + $0xa0] sm:$0xf]
  %v62 = vld [vmem:[%s0 + $0xa4] sm:$0xf]
  %v63 = vld [vmem:[%s0 + $0xa8] sm:$0xf]
  %v64 = vld [vmem:[%s0 + $0xac] sm:$0xf]
  %v65 = vld [vmem:[%s0 + $0xb0] sm:$0xf]
  %v66 = vld [vmem:[%s0 + $0xb4] sm:$0xf]
  %v67 = vld [vmem:[%s0 + $0xb8] sm:$0xf]
  %v68 = vld [vmem:[%s0 + $0xbc] sm:$0xf]
  %v69 = vld [vmem:[%s0 + $0xc0] sm:$0xf]
  %v70 = vld [vmem:[%s0 + $0xc4] sm:$0xf]
  %v71 = vld [vmem:[%s0 + $0xc8] sm:$0xf]
  %v72 = vld [vmem:[%s0 + $0xcc] sm:$0xf]
  %v73 = vld [vmem:[%s0 + $0xd0] sm:$0xf]
  %v74 = vld [vmem:[%s0 + $0xd4] sm:$0xf]
  %v75 = vld [vmem:[%s0 + $0xd8] sm:$0xf]
  %v76 = vld [vmem:[%s0 + $0xdc] sm:$0xf]
  %v77 = vld [vmem:[%s0 + $0xe0] sm:$0xf]
  %v78 = vld [vmem:[%s0 + $0xe4] sm:$0xf]
  %v79 = vld [vmem:[%s0 + $0xe8] sm:$0xf]
  %v80 = vld [vmem:[%s0 + $0xec] sm:$0xf]
  %v81 = vld [vmem:[%s0 + $0xf0] sm:$0xf]
  %v82 = vld [vmem:[%s0 + $0xf4] sm:$0xf]
  %v83 = vld [vmem:[%s0 + $0xf8] sm:$0xf]
  %v84 = vld [vmem:[%s0 + $0xfc] sm:$0xf]
  %v85 = vld [vmem:[%s0 + $0x100] sm:$0xf]
  %v86 = vld [vmem:[%s0 + $0x104] sm:$0xf]
  %v87 = vld [vmem:[%s0 + $0x108] sm:$0xf]
  %v88 = vld [vmem:[%s0 + $0x10c] sm:$0xf]
  %v89 = vld [vmem:[%s0 + $0x110] sm:$0xf]
  %v90 = vld [vmem:[%s0 + $0x114] sm:$0xf]
  %v91 = vld [vmem:[%s0 + $0x118] sm:$0xf]
  %v92 = vld [vmem:[%s0 + $0x11c] sm:$0xf]
  %v93 = vld [vmem:[%s0 + $0x120] sm:$0xf]
  %v94 = vld [vmem:[%s0 + $0x124] sm:$0xf]
  %v95 = vld [vmem:[%s0 + $0x128] sm:$0xf]
  %v96 = vld [vmem:[%s0 + $0x12c] sm:$0xf]
  %v97 = vld [vmem:[%s0 + $0x130] sm:$0xf]
  %v98 = vld [vmem:[%s0 + $0x134] sm:$0xf]
  %v99 = vld [vmem:[%s0 + $0x138] sm:$0xf]
  %v100 = vld [vmem:[%s0 + $0x13c] sm:$0xf]
  %v101 = vld [vmem:[%s0 + $0x140] sm:$0xf]
  %v102 = vld [vmem:[%s0 + $0x144] sm:$0xf]
  %v103 = vld [vmem:[%s0 + $0x148] sm:$0xf]
  %v104 = vld [vmem:[%s0 + $0x14c] sm:$0xf]
  %v105 = vld [vmem:[%s0 + $0x150] sm:$0xf]
  %v106 = vld [vmem:[%s0 + $0x154] sm:$0xf]
  %v107 = vld [vmem:[%s0 + $0x158] sm:$0xf]
  %v108 = vld [vmem:[%s0 + $0x15c] sm:$0xf]
  %v109 = vld [vmem:[%s0 + $0x160] sm:$0xf]
  %v110 = vld [vmem:[%s0 + $0x164] sm:$0xf]
  %v111 = vld [vmem:[%s0 + $0x168] sm:$0xf]
  %v112 = vld [vmem:[%s0 + $0x16c] sm:$0xf]
  %v113 = vld [vmem:[%s0 + $0x170] sm:$0xf]
  %v114 = vld [vmem:[%s0 + $0x174] sm:$0xf]
  %v115 = vld [vmem:[%s0 + $0x178] sm:$0xf]
  %v116 = vld [vmem:[%s0 + $0x17c] sm:$0xf]
  %v117 = vld [vmem:[%s0 + $0x180] sm:$0xf]
  %v118 = vld [vmem:[%s0 + $0x184] sm:$0xf]
  %v119 = vld [vmem:[%s0 + $0x188] sm:$0xf]
  %v120 = vld [vmem:[%s0 + $0x18c] sm:$0xf]
  %v121 = vld [vmem:[%s0 + $0x190] sm:$0xf]
  %v122 = vld [vmem:[%s0 + $0x194] sm:$0xf]
  %v123 = vld [vmem:[%s0 + $0x198] sm:$0xf]
  %v124 = vld [vmem:[%s0 + $0x19c] sm:$0xf]
  %v125 = vld [vmem:[%s0 + $0x1a0] sm:$0xf]
  %v126 = vld [vmem:[%s0 + $0x1a4] sm:$0xf]
  %v127 = vld [vmem:[%s0 + $0x1a8] sm:$0xf]
  %v128 = vld [vmem:[%s0 + $0x1ac] sm:$0xf]
  %v129 = vld [vmem:[%s0 + $0x1b0] sm:$0xf]
  %v130 = vld [vmem:[%s0 + $0x1b4] sm:$0xf]
  %v131 = vld [vmem:[%s0 + $0x1b8] sm:$0xf]
  %v132 = vld [vmem:[%s0 + $0x1bc] sm:$0xf]
  %v133 = vld [vmem:[%s0 + $0x1c0] sm:$0xf]
  %v134 = vld [vmem:[%s0 + $0x1c4] sm:$0xf]
  %v135 = vld [vmem:[%s0 + $0x1c8] sm:$0xf]
  %v136 = vld [vmem:[%s0 + $0x1cc] sm:$0xf]
  %v137 = vld [vmem:[%s0 + $0x1d0] sm:$0xf]
  %v138 = vld [vmem:[%s0 + $0x1d4] sm:$0xf]
  %v139 = vld [vmem:[%s0 + $0x1d8] sm:$0xf]
  %v140 = vld [vmem:[%s0 + $0x1dc] sm:$0xf]
  %v141 = vld [vmem:[%s0 + $0x1e0] sm:$0xf]
  %v142 = vld [vmem:[%s0 + $0x1e4] sm:$0xf]
  %v143 = vld [vmem:[%s0 + $0x1e8] sm:$0xf]
  %v144 = vld [vmem:[%s0 + $0x1ec] sm:$0xf]
  %v145 = vld [vmem:[%s0 + $0x1f0] sm:$0xf]
  %v146 = vld [vmem:[%s0 + $0x1f4] sm:$0xf]
  %v147 = vld [vmem:[%s0 + $0x1f8] sm:$0xf]
  %v148 = vld [vmem:[%s0 + $0x1fc] sm:$0xf]
  %v149 = vld [vmem:[%s0 + $0x200] sm:$0xf]
  %v150 = vld [vmem:[%s0 + $0x204] sm:$0xf]
  %v151 = vld [vmem:[%s0 + $0x208] sm:$0xf]
  %v152 = vld [vmem:[%s0 + $0x20c] sm:$0xf]
  %v153 = vld [vmem:[%s0 + $0x210] sm:$0xf]
  %v154 = vld [vmem:[%s0 + $0x214] sm:$0xf]
  %v155 = vld [vmem:[%s0 + $0x218] sm:$0xf]
  %v156 = vld [vmem:[%s0 + $0x21c] sm:$0xf]
  %v157 = vld [vmem:[%s0 + $0x220] sm:$0xf]
  %v158 = vld [vmem:[%s0 + $0x224] sm:$0xf]
  %v159 = vld [vmem:[%s0 + $0x228] sm:$0xf]
  %v160 = vld [vmem:[%s0 + $0x22c] sm:$0xf]
  %v161 = vld [vmem:[%s0 + $0x230] sm:$0xf]
  %v162 = vld [vmem:[%s0 + $0x234] sm:$0xf]
  %v163 = vld [vmem:[%s0 + $0x238] sm:$0xf]
  %v164 = vld [vmem:[%s0 + $0x23c] sm:$0xf]
  %v165 = vld [vmem:[%s1] sm:$0xf]
  %v166 = vld [vmem:[%s1 + $0x4] sm:$0xf]
  %v167 = vld [vmem:[%s1 + $0x8] sm:$0xf]
  %v168 = vld [vmem:[%s1 + $0xc] sm:$0xf]
  %v169 = vld [vmem:[%s1 + $0x10] sm:$0xf]
  %v170 = vld [vmem:[%s1 + $0x14] sm:$0xf]
  %v171 = vld [vmem:[%s1 + $0x18] sm:$0xf]
  %v172 = vld [vmem:[%s1 + $0x1c] sm:$0xf]
  %v173 = vld [vmem:[%s1 + $0x20] sm:$0xf]
  %v174 = vld [vmem:[%s1 + $0x24] sm:$0xf]
  %v175 = vld [vmem:[%s1 + $0x28] sm:$0xf]
  %v176 = vld [vmem:[%s1 + $0x2c] sm:$0xf]
  %v177 = vld [vmem:[%s1 + $0x30] sm:$0xf]
  %v178 = vld [vmem:[%s1 + $0x34] sm:$0xf]
  %v179 = vld [vmem:[%s1 + $0x38] sm:$0xf]
  %v180 = vld [vmem:[%s1 + $0x3c] sm:$0xf]
  %v181 = vld [vmem:[%s2] sm:$0x1]
  %v183 = vlaneseq
  %v184 = vshrl.u32 %v183, 7
  %v185 = vsub.s32 0, %v184
  %v186 = vrot.slane %v181, %v185
  %v332 = vunpack.c.l.b16 %v21
  %v333 = vunpack.c.l.b16 %v22
  %v334 = vunpack.c.l.b16 %v23
  %v335 = vunpack.c.l.b16 %v24
  %v336 = vunpack.c.l.b16 %v25
  %v337 = vunpack.c.l.b16 %v26
  %v338 = vunpack.c.l.b16 %v27
  %v339 = vunpack.c.l.b16 %v28
  %v340 = vunpack.c.l.b16 %v29
  %v341 = vunpack.c.l.b16 %v30
  %v342 = vunpack.c.l.b16 %v31
  %v343 = vunpack.c.l.b16 %v32
  %v344 = vunpack.c.l.b16 %v33
  %v345 = vunpack.c.l.b16 %v34
  %v346 = vunpack.c.l.b16 %v35
  %v347 = vunpack.c.l.b16 %v36
  %v348 = vunpack.c.l.b16 %v37
  %v349 = vunpack.c.l.b16 %v38
  %v350 = vunpack.c.l.b16 %v39
  %v351 = vunpack.c.l.b16 %v40
  %v352 = vunpack.c.l.b16 %v41
  %v353 = vunpack.c.l.b16 %v42
  %v354 = vunpack.c.l.b16 %v43
  %v355 = vunpack.c.l.b16 %v44
  %v356 = vunpack.c.l.b16 %v45
  %v357 = vunpack.c.l.b16 %v46
  %v358 = vunpack.c.l.b16 %v47
  %v359 = vunpack.c.l.b16 %v48
  %v360 = vunpack.c.l.b16 %v49
  %v361 = vunpack.c.l.b16 %v50
  %v362 = vunpack.c.l.b16 %v51
  %v363 = vunpack.c.l.b16 %v52
  %v364 = vunpack.c.l.b16 %v53
  %v365 = vunpack.c.l.b16 %v54
  %v366 = vunpack.c.l.b16 %v55
  %v367 = vunpack.c.l.b16 %v56
  %v368 = vunpack.c.l.b16 %v57
  %v369 = vunpack.c.l.b16 %v58
  %v370 = vunpack.c.l.b16 %v59
  %v371 = vunpack.c.l.b16 %v60
  %v372 = vunpack.c.l.b16 %v61
  %v373 = vunpack.c.l.b16 %v62
  %v374 = vunpack.c.l.b16 %v63
  %v375 = vunpack.c.l.b16 %v64
  %v376 = vunpack.c.l.b16 %v65
  %v377 = vunpack.c.l.b16 %v66
  %v378 = vunpack.c.l.b16 %v67
  %v379 = vunpack.c.l.b16 %v68
  %v380 = vunpack.c.l.b16 %v69
  %v381 = vunpack.c.l.b16 %v70
  %v382 = vunpack.c.l.b16 %v71
  %v383 = vunpack.c.l.b16 %v72
  %v384 = vunpack.c.l.b16 %v73
  %v385 = vunpack.c.l.b16 %v74
  %v386 = vunpack.c.l.b16 %v75
  %v387 = vunpack.c.l.b16 %v76
  %v388 = vunpack.c.l.b16 %v77
  %v389 = vunpack.c.l.b16 %v78
  %v390 = vunpack.c.l.b16 %v79
  %v391 = vunpack.c.l.b16 %v80
  %v392 = vunpack.c.l.b16 %v81
  %v393 = vunpack.c.l.b16 %v82
  %v394 = vunpack.c.l.b16 %v83
  %v395 = vunpack.c.l.b16 %v84
  %v396 = vunpack.c.l.b16 %v85
  %v397 = vunpack.c.l.b16 %v86
  %v398 = vunpack.c.l.b16 %v87
  %v399 = vunpack.c.l.b16 %v88
  %v400 = vunpack.c.l.b16 %v89
  %v401 = vunpack.c.l.b16 %v90
  %v402 = vunpack.c.l.b16 %v91
  %v403 = vunpack.c.l.b16 %v92
  %v404 = vunpack.c.l.b16 %v93
  %v405 = vunpack.c.l.b16 %v94
  %v406 = vunpack.c.l.b16 %v95
  %v407 = vunpack.c.l.b16 %v96
  %v408 = vunpack.c.l.b16 %v97
  %v409 = vunpack.c.l.b16 %v98
  %v410 = vunpack.c.l.b16 %v99
  %v411 = vunpack.c.l.b16 %v100
  %v412 = vunpack.c.l.b16 %v101
  %v413 = vunpack.c.l.b16 %v102
  %v414 = vunpack.c.l.b16 %v103
  %v415 = vunpack.c.l.b16 %v104
  %v416 = vunpack.c.l.b16 %v105
  %v417 = vunpack.c.l.b16 %v106
  %v418 = vunpack.c.l.b16 %v107
  %v419 = vunpack.c.l.b16 %v108
  %v420 = vunpack.c.l.b16 %v109
  %v421 = vunpack.c.l.b16 %v110
  %v422 = vunpack.c.l.b16 %v111
  %v423 = vunpack.c.l.b16 %v112
  %v424 = vunpack.c.l.b16 %v113
  %v425 = vunpack.c.l.b16 %v114
  %v426 = vunpack.c.l.b16 %v115
  %v427 = vunpack.c.l.b16 %v116
  %v428 = vunpack.c.l.b16 %v117
  %v429 = vunpack.c.l.b16 %v118
  %v430 = vunpack.c.l.b16 %v119
  %v431 = vunpack.c.l.b16 %v120
  %v432 = vunpack.c.l.b16 %v121
  %v433 = vunpack.c.l.b16 %v122
  %v434 = vunpack.c.l.b16 %v123
  %v435 = vunpack.c.l.b16 %v124
  %v436 = vunpack.c.l.b16 %v125
  %v437 = vunpack.c.l.b16 %v126
  %v438 = vunpack.c.l.b16 %v127
  %v439 = vunpack.c.l.b16 %v128
  %v440 = vunpack.c.l.b16 %v129
  %v441 = vunpack.c.l.b16 %v130
  %v442 = vunpack.c.l.b16 %v131
  %v443 = vunpack.c.l.b16 %v132
  %v444 = vunpack.c.l.b16 %v133
  %v445 = vunpack.c.l.b16 %v134
  %v446 = vunpack.c.l.b16 %v135
  %v447 = vunpack.c.l.b16 %v136
  %v448 = vunpack.c.l.b16 %v137
  %v449 = vunpack.c.l.b16 %v138
  %v450 = vunpack.c.l.b16 %v139
  %v451 = vunpack.c.l.b16 %v140
  %v452 = vunpack.c.l.b16 %v141
  %v453 = vunpack.c.l.b16 %v142
  %v454 = vunpack.c.l.b16 %v143
  %v455 = vunpack.c.l.b16 %v144
  %v456 = vunpack.c.l.b16 %v145
  %v457 = vunpack.c.l.b16 %v146
  %v458 = vunpack.c.l.b16 %v147
  %v459 = vunpack.c.l.b16 %v148
  %v460 = vunpack.c.l.b16 %v149
  %v461 = vunpack.c.l.b16 %v150
  %v462 = vunpack.c.l.b16 %v151
  %v463 = vunpack.c.l.b16 %v152
  %v464 = vunpack.c.l.b16 %v153
  %v465 = vunpack.c.l.b16 %v154
  %v466 = vunpack.c.l.b16 %v155
  %v467 = vunpack.c.l.b16 %v156
  %v468 = vunpack.c.l.b16 %v157
  %v469 = vunpack.c.l.b16 %v158
  %v470 = vunpack.c.l.b16 %v159
  %v471 = vunpack.c.l.b16 %v160
  %v472 = vunpack.c.l.b16 %v161
  %v473 = vunpack.c.l.b16 %v162
  %v474 = vunpack.c.l.b16 %v163
  %v475 = vunpack.c.l.b16 %v164
  %v476 = vpack.c.b16 %v333, %v332
  %v477 = vpack.c.b16 %v335, %v334
  %v478 = vpack.c.b16 %v337, %v336
  %v479 = vpack.c.b16 %v339, %v338
  %v480 = vpack.c.b16 %v341, %v340
  %v481 = vpack.c.b16 %v343, %v342
  %v482 = vpack.c.b16 %v345, %v344
  %v483 = vpack.c.b16 %v347, %v346
  %v484 = vpack.c.b16 %v349, %v348
  %v485 = vpack.c.b16 %v351, %v350
  %v486 = vpack.c.b16 %v353, %v352
  %v487 = vpack.c.b16 %v355, %v354
  %v488 = vpack.c.b16 %v357, %v356
  %v489 = vpack.c.b16 %v359, %v358
  %v490 = vpack.c.b16 %v361, %v360
  %v491 = vpack.c.b16 %v363, %v362
  %v492 = vpack.c.b16 %v365, %v364
  %v493 = vpack.c.b16 %v367, %v366
  %v494 = vpack.c.b16 %v369, %v368
  %v495 = vpack.c.b16 %v371, %v370
  %v496 = vpack.c.b16 %v373, %v372
  %v497 = vpack.c.b16 %v375, %v374
  %v498 = vpack.c.b16 %v377, %v376
  %v499 = vpack.c.b16 %v379, %v378
  %v500 = vpack.c.b16 %v381, %v380
  %v501 = vpack.c.b16 %v383, %v382
  %v502 = vpack.c.b16 %v385, %v384
  %v503 = vpack.c.b16 %v387, %v386
  %v504 = vpack.c.b16 %v389, %v388
  %v505 = vpack.c.b16 %v391, %v390
  %v506 = vpack.c.b16 %v393, %v392
  %v507 = vpack.c.b16 %v395, %v394
  %v508 = vpack.c.b16 %v397, %v396
  %v509 = vpack.c.b16 %v399, %v398
  %v510 = vpack.c.b16 %v401, %v400
  %v511 = vpack.c.b16 %v403, %v402
  %v512 = vpack.c.b16 %v405, %v404
  %v513 = vpack.c.b16 %v407, %v406
  %v514 = vpack.c.b16 %v409, %v408
  %v515 = vpack.c.b16 %v411, %v410
  %v516 = vpack.c.b16 %v413, %v412
  %v517 = vpack.c.b16 %v415, %v414
  %v518 = vpack.c.b16 %v417, %v416
  %v519 = vpack.c.b16 %v419, %v418
  %v520 = vpack.c.b16 %v421, %v420
  %v521 = vpack.c.b16 %v423, %v422
  %v522 = vpack.c.b16 %v425, %v424
  %v523 = vpack.c.b16 %v427, %v426
  %v524 = vpack.c.b16 %v429, %v428
  %v525 = vpack.c.b16 %v431, %v430
  %v526 = vpack.c.b16 %v433, %v432
  %v527 = vpack.c.b16 %v435, %v434
  %v528 = vpack.c.b16 %v437, %v436
  %v529 = vpack.c.b16 %v439, %v438
  %v530 = vpack.c.b16 %v441, %v440
  %v531 = vpack.c.b16 %v443, %v442
  %v532 = vpack.c.b16 %v445, %v444
  %v533 = vpack.c.b16 %v447, %v446
  %v534 = vpack.c.b16 %v449, %v448
  %v535 = vpack.c.b16 %v451, %v450
  %v536 = vpack.c.b16 %v453, %v452
  %v537 = vpack.c.b16 %v455, %v454
  %v538 = vpack.c.b16 %v457, %v456
  %v539 = vpack.c.b16 %v459, %v458
  %v540 = vpack.c.b16 %v461, %v460
  %v541 = vpack.c.b16 %v463, %v462
  %v542 = vpack.c.b16 %v465, %v464
  %v543 = vpack.c.b16 %v467, %v466
  %v544 = vpack.c.b16 %v469, %v468
  %v545 = vpack.c.b16 %v471, %v470
  %v546 = vpack.c.b16 %v473, %v472
  %v547 = vpack.c.b16 %v475, %v474
  %v636 = vunpack.c.l.b16 %v165
  %v637 = vunpack.c.l.b16 %v166
  %v638 = vunpack.c.l.b16 %v167
  %v639 = vunpack.c.l.b16 %v168
  %v640 = vunpack.c.l.b16 %v169
  %v641 = vunpack.c.l.b16 %v170
  %v642 = vunpack.c.l.b16 %v171
  %v643 = vunpack.c.l.b16 %v172
  %v644 = vunpack.c.l.b16 %v173
  %v645 = vunpack.c.l.b16 %v174
  %v646 = vunpack.c.l.b16 %v175
  %v647 = vunpack.c.l.b16 %v176
  %v648 = vunpack.c.l.b16 %v177
  %v649 = vunpack.c.l.b16 %v178
  %v650 = vunpack.c.l.b16 %v179
  %v651 = vunpack.c.l.b16 %v180
  %v652 = vpack.c.b16 %v637, %v636
  %v653 = vpack.c.b16 %v639, %v638
  %v654 = vpack.c.b16 %v641, %v640
  %v655 = vpack.c.b16 %v643, %v642
  %v656 = vpack.c.b16 %v645, %v644
  %v657 = vpack.c.b16 %v647, %v646
  %v658 = vpack.c.b16 %v649, %v648
  %v659 = vpack.c.b16 %v651, %v650
  %668 = vmatprep.subr.bf16.mxu0 0
  %669 = vmatpush1.bf16.msra.mxu0 %v652
  %670 = vmatprep.subr.bf16.mxu0 0
  %671 = vmatpush1.bf16.msra.mxu0 %v653
  %672 = vmatprep.subr.bf16.mxu0 0
  %673 = vmatpush1.bf16.msra.mxu0 %v654
  %674 = vmatprep.subr.bf16.mxu0 0
  %675 = vmatpush1.bf16.msra.mxu0 %v655
  %676 = vmatprep.subr.bf16.mxu0 0
  %677 = vmatpush1.bf16.msra.mxu0 %v656
  %678 = vmatprep.subr.bf16.mxu0 0
  %679 = vmatpush1.bf16.msra.mxu0 %v657
  %680 = vmatprep.subr.bf16.mxu0 0
  %681 = vmatpush1.bf16.msra.mxu0 %v658
  %682 = vmatprep.subr.bf16.mxu0 0
  %683 = vmatpush1.bf16.msra.mxu0 %v659
  %684 = vmatprep.subr.bf16.mxu0 0
  %685 = vmatpush1.bf16.msra.mxu0 0
  %686 = vmatprep.subr.bf16.mxu0 0
  %687 = vmatpush1.bf16.msra.mxu0 0
  %688 = vmatprep.subr.bf16.mxu0 0
  %689 = vmatpush1.bf16.msra.mxu0 0
  %690 = vmatprep.subr.bf16.mxu0 0
  %691 = vmatpush1.bf16.msra.mxu0 0
  %692 = vmatprep.subr.bf16.mxu0 0
  %693 = vmatpush1.bf16.msra.mxu0 0
  %694 = vmatprep.subr.bf16.mxu0 0
  %695 = vmatpush1.bf16.msra.mxu0 0
  %696 = vmatprep.subr.bf16.mxu0 0
  %697 = vmatpush1.bf16.msra.mxu0 0
  %698 = vmatprep.subr.bf16.mxu0 0
  %699 = vmatpush1.bf16.msra.mxu0 0
  %700 = vmatprep.mubr.bf16.mxu0 0
  %701 = vmatmul.mubr.bf16.gmra.mrb[0].mxu0 %v476
  %v702 = vpop.f32.mrb[0].mxu0
  %v703 = vadd.f32 %v186, %v702
  %v704 = vpop.f32.mrb[0].mxu0
  %v705 = vpop.f32.mrb[0].mxu0
  %v706 = vadd.f32 %v186, %v705
  %v707 = vpop.f32.mrb[0].mxu0
  %708 = vmatprep.mubr.bf16.mxu0 0
  %709 = vmatmul.mubr.bf16.gmra.mrb[0].mxu0 %v477
  %v710 = vpop.f32.mrb[0].mxu0
  %v711 = vadd.f32 %v186, %v710
  %v712 = vpop.f32.mrb[0].mxu0
  %v713 = vpop.f32.mrb[0].mxu0
  %v714 = vadd.f32 %v186, %v713
  %v715 = vpop.f32.mrb[0].mxu0
  %716 = vmatprep.mubr.bf16.mxu0 0
  %717 = vmatmul.mubr.bf16.gmra.mrb[0].mxu0 %v478
  %v718 = vpop.f32.mrb[0].mxu0
  %v719 = vadd.f32 %v186, %v718
  %v720 = vpop.f32.mrb[0].mxu0
  %v721 = vpop.f32.mrb[0].mxu0
  %v722 = vadd.f32 %v186, %v721
  %v723 = vpop.f32.mrb[0].mxu0
  %724 = vmatprep.mubr.bf16.mxu0 0
  %725 = vmatmul.mubr.bf16.gmra.mrb[0].mxu0 %v479
  %v726 = vpop.f32.mrb[0].mxu0
  %v727 = vadd.f32 %v186, %v726
  %v728 = vpop.f32.mrb[0].mxu0
  %v729 = vpop.f32.mrb[0].mxu0
  %v730 = vadd.f32 %v186, %v729
  %v731 = vpop.f32.mrb[0].mxu0
  %732 = vmatprep.mubr.bf16.mxu0 0
  %733 = vmatmul.mubr.bf16.gmra.mrb[0].mxu0 %v480
  %v734 = vpop.f32.mrb[0].mxu0
  %v735 = vadd.f32 %v186, %v734
  %v736 = vpop.f32.mrb[0].mxu0
  %v737 = vpop.f32.mrb[0].mxu0
  %v738 = vadd.f32 %v186, %v737
  %v739 = vpop.f32.mrb[0].mxu0
  %740 = vmatprep.mubr.bf16.mxu0 0
  %741 = vmatmul.mubr.bf16.gmra.mrb[0].mxu0 %v481
  %v742 = vpop.f32.mrb[0].mxu0
  %v743 = vadd.f32 %v186, %v742
  %v744 = vpop.f32.mrb[0].mxu0
  %v745 = vpop.f32.mrb[0].mxu0
  %v746 = vadd.f32 %v186, %v745
  %v747 = vpop.f32.mrb[0].mxu0
  %748 = vmatprep.mubr.bf16.mxu0 0
  %749 = vmatmul.mubr.bf16.gmra.mrb[0].mxu0 %v482
  %v750 = vpop.f32.mrb[0].mxu0
  %v751 = vadd.f32 %v186, %v750
  %v752 = vpop.f32.mrb[0].mxu0
  %v753 = vpop.f32.mrb[0].mxu0
  %v754 = vadd.f32 %v186, %v753
  %v755 = vpop.f32.mrb[0].mxu0
  %756 = vmatprep.mubr.bf16.mxu0 0
  %757 = vmatmul.mubr.bf16.gmra.mrb[0].mxu0 %v483
  %v758 = vpop.f32.mrb[0].mxu0
  %v759 = vadd.f32 %v186, %v758
  %v760 = vpop.f32.mrb[0].mxu0
  %v761 = vpop.f32.mrb[0].mxu0
  %v762 = vadd.f32 %v186, %v761
  %v763 = vpop.f32.mrb[0].mxu0
  %764 = vmatprep.mubr.bf16.mxu0 0
  %765 = vmatmul.mubr.bf16.gmra.mrb[0].mxu0 %v484
  %v766 = vpop.f32.mrb[0].mxu0
  %v767 = vadd.f32 %v186, %v766
  %v768 = vpop.f32.mrb[0].mxu0
  %v769 = vpop.f32.mrb[0].mxu0
  %v770 = vadd.f32 %v186, %v769
  %v771 = vpop.f32.mrb[0].mxu0
  %772 = vmatprep.mubr.bf16.mxu0 0
  %773 = vmatmul.mubr.bf16.gmra.mrb[0].mxu0 %v485
  %v774 = vpop.f32.mrb[0].mxu0
  %v775 = vadd.f32 %v186, %v774
  %v776 = vpop.f32.mrb[0].mxu0
  %v777 = vpop.f32.mrb[0].mxu0
  %v778 = vadd.f32 %v186, %v777
  %v779 = vpop.f32.mrb[0].mxu0
  %780 = vmatprep.mubr.bf16.mxu0 0
  %781 = vmatmul.mubr.bf16.gmra.mrb[0].mxu0 %v486
  %v782 = vpop.f32.mrb[0].mxu0
  %v783 = vadd.f32 %v186, %v782
  %v784 = vpop.f32.mrb[0].mxu0
  %v785 = vpop.f32.mrb[0].mxu0
  %v786 = vadd.f32 %v186, %v785
  %v787 = vpop.f32.mrb[0].mxu0
  %788 = vmatprep.mubr.bf16.mxu0 0
  %789 = vmatmul.mubr.bf16.gmra.mrb[0].mxu0 %v487
  %v790 = vpop.f32.mrb[0].mxu0
  %v791 = vadd.f32 %v186, %v790
  %v792 = vpop.f32.mrb[0].mxu0
  %v793 = vpop.f32.mrb[0].mxu0
  %v794 = vadd.f32 %v186, %v793
  %v795 = vpop.f32.mrb[0].mxu0
  %796 = vmatprep.mubr.bf16.mxu0 0
  %797 = vmatmul.mubr.bf16.gmra.mrb[0].mxu0 %v488
  %v798 = vpop.f32.mrb[0].mxu0
  %v799 = vadd.f32 %v186, %v798
  %v800 = vpop.f32.mrb[0].mxu0
  %v801 = vpop.f32.mrb[0].mxu0
  %v802 = vadd.f32 %v186, %v801
  %v803 = vpop.f32.mrb[0].mxu0
  %804 = vmatprep.mubr.bf16.mxu0 0
  %805 = vmatmul.mubr.bf16.gmra.mrb[0].mxu0 %v489
  %v806 = vpop.f32.mrb[0].mxu0
  %v807 = vadd.f32 %v186, %v806
  %v808 = vpop.f32.mrb[0].mxu0
  %v809 = vpop.f32.mrb[0].mxu0
  %v810 = vadd.f32 %v186, %v809
  %v811 = vpop.f32.mrb[0].mxu0
  %812 = vmatprep.mubr.bf16.mxu0 0
  %813 = vmatmul.mubr.bf16.gmra.mrb[0].mxu0 %v490
  %v814 = vpop.f32.mrb[0].mxu0
  %v815 = vadd.f32 %v186, %v814
  %v816 = vpop.f32.mrb[0].mxu0
  %v817 = vpop.f32.mrb[0].mxu0
  %v818 = vadd.f32 %v186, %v817
  %v819 = vpop.f32.mrb[0].mxu0
  %820 = vmatprep.mubr.bf16.mxu0 0
  %821 = vmatmul.mubr.bf16.gmra.mrb[0].mxu0 %v491
  %v822 = vpop.f32.mrb[0].mxu0
  %v823 = vadd.f32 %v186, %v822
  %v824 = vpop.f32.mrb[0].mxu0
  %v825 = vpop.f32.mrb[0].mxu0
  %v826 = vadd.f32 %v186, %v825
  %v827 = vpop.f32.mrb[0].mxu0
  %828 = vmatprep.mubr.bf16.mxu0 0
  %829 = vmatmul.mubr.bf16.gmra.mrb[0].mxu0 %v492
  %v830 = vpop.f32.mrb[0].mxu0
  %v831 = vadd.f32 %v186, %v830
  %v832 = vpop.f32.mrb[0].mxu0
  %v833 = vpop.f32.mrb[0].mxu0
  %v834 = vadd.f32 %v186, %v833
  %v835 = vpop.f32.mrb[0].mxu0
  %836 = vmatprep.mubr.bf16.mxu0 0
  %837 = vmatmul.mubr.bf16.gmra.mrb[0].mxu0 %v493
  %v838 = vpop.f32.mrb[0].mxu0
  %v839 = vadd.f32 %v186, %v838
  %v840 = vpop.f32.mrb[0].mxu0
  %v841 = vpop.f32.mrb[0].mxu0
  %v842 = vadd.f32 %v186, %v841
  %v843 = vpop.f32.mrb[0].mxu0
  %844 = vmatprep.mubr.bf16.mxu0 0
  %845 = vmatmul.mubr.bf16.gmra.mrb[0].mxu0 %v494
  %v846 = vpop.f32.mrb[0].mxu0
  %v847 = vadd.f32 %v186, %v846
  %v848 = vpop.f32.mrb[0].mxu0
  %v849 = vpop.f32.mrb[0].mxu0
  %v850 = vadd.f32 %v186, %v849
  %v851 = vpop.f32.mrb[0].mxu0
  %852 = vmatprep.mubr.bf16.mxu0 0
  %853 = vmatmul.mubr.bf16.gmra.mrb[0].mxu0 %v495
  %v854 = vpop.f32.mrb[0].mxu0
  %v855 = vadd.f32 %v186, %v854
  %v856 = vpop.f32.mrb[0].mxu0
  %v857 = vpop.f32.mrb[0].mxu0
  %v858 = vadd.f32 %v186, %v857
  %v859 = vpop.f32.mrb[0].mxu0
  %860 = vmatprep.mubr.bf16.mxu0 0
  %861 = vmatmul.mubr.bf16.gmra.mrb[0].mxu0 %v496
  %v862 = vpop.f32.mrb[0].mxu0
  %v863 = vadd.f32 %v186, %v862
  %v864 = vpop.f32.mrb[0].mxu0
  %v865 = vpop.f32.mrb[0].mxu0
  %v866 = vadd.f32 %v186, %v865
  %v867 = vpop.f32.mrb[0].mxu0
  %868 = vmatprep.mubr.bf16.mxu0 0
  %869 = vmatmul.mubr.bf16.gmra.mrb[0].mxu0 %v497
  %v870 = vpop.f32.mrb[0].mxu0
  %v871 = vadd.f32 %v186, %v870
  %v872 = vpop.f32.mrb[0].mxu0
  %v873 = vpop.f32.mrb[0].mxu0
  %v874 = vadd.f32 %v186, %v873
  %v875 = vpop.f32.mrb[0].mxu0
  %876 = vmatprep.mubr.bf16.mxu0 0
  %877 = vmatmul.mubr.bf16.gmra.mrb[0].mxu0 %v498
  %v878 = vpop.f32.mrb[0].mxu0
  %v879 = vadd.f32 %v186, %v878
  %v880 = vpop.f32.mrb[0].mxu0
  %v881 = vpop.f32.mrb[0].mxu0
  %v882 = vadd.f32 %v186, %v881
  %v883 = vpop.f32.mrb[0].mxu0
  %884 = vmatprep.mubr.bf16.mxu0 0
  %885 = vmatmul.mubr.bf16.gmra.mrb[0].mxu0 %v499
  %v886 = vpop.f32.mrb[0].mxu0
  %v887 = vadd.f32 %v186, %v886
  %v888 = vpop.f32.mrb[0].mxu0
  %v889 = vpop.f32.mrb[0].mxu0
  %v890 = vadd.f32 %v186, %v889
  %v891 = vpop.f32.mrb[0].mxu0
  %892 = vmatprep.mubr.bf16.mxu0 0
  %893 = vmatmul.mubr.bf16.gmra.mrb[0].mxu0 %v500
  %v894 = vpop.f32.mrb[0].mxu0
  %v895 = vadd.f32 %v186, %v894
  %v896 = vpop.f32.mrb[0].mxu0
  %v897 = vpop.f32.mrb[0].mxu0
  %v898 = vadd.f32 %v186, %v897
  %v899 = vpop.f32.mrb[0].mxu0
  %900 = vmatprep.mubr.bf16.mxu0 0
  %901 = vmatmul.mubr.bf16.gmra.mrb[0].mxu0 %v501
  %v902 = vpop.f32.mrb[0].mxu0
  %v903 = vadd.f32 %v186, %v902
  %v904 = vpop.f32.mrb[0].mxu0
  %v905 = vpop.f32.mrb[0].mxu0
  %v906 = vadd.f32 %v186, %v905
  %v907 = vpop.f32.mrb[0].mxu0
  %908 = vmatprep.mubr.bf16.mxu0 0
  %909 = vmatmul.mubr.bf16.gmra.mrb[0].mxu0 %v502
  %v910 = vpop.f32.mrb[0].mxu0
  %v911 = vadd.f32 %v186, %v910
  %v912 = vpop.f32.mrb[0].mxu0
  %v913 = vpop.f32.mrb[0].mxu0
  %v914 = vadd.f32 %v186, %v913
  %v915 = vpop.f32.mrb[0].mxu0
  %916 = vmatprep.mubr.bf16.mxu0 0
  %917 = vmatmul.mubr.bf16.gmra.mrb[0].mxu0 %v503
  %v918 = vpop.f32.mrb[0].mxu0
  %v919 = vadd.f32 %v186, %v918
  %v920 = vpop.f32.mrb[0].mxu0
  %v921 = vpop.f32.mrb[0].mxu0
  %v922 = vadd.f32 %v186, %v921
  %v923 = vpop.f32.mrb[0].mxu0
  %924 = vmatprep.mubr.bf16.mxu0 0
  %925 = vmatmul.mubr.bf16.gmra.mrb[0].mxu0 %v504
  %v926 = vpop.f32.mrb[0].mxu0
  %v927 = vadd.f32 %v186, %v926
  %v928 = vpop.f32.mrb[0].mxu0
  %v929 = vpop.f32.mrb[0].mxu0
  %v930 = vadd.f32 %v186, %v929
  %v931 = vpop.f32.mrb[0].mxu0
  %932 = vmatprep.mubr.bf16.mxu0 0
  %933 = vmatmul.mubr.bf16.gmra.mrb[0].mxu0 %v505
  %v934 = vpop.f32.mrb[0].mxu0
  %v935 = vadd.f32 %v186, %v934
  %v936 = vpop.f32.mrb[0].mxu0
  %v937 = vpop.f32.mrb[0].mxu0
  %v938 = vadd.f32 %v186, %v937
  %v939 = vpop.f32.mrb[0].mxu0
  %940 = vmatprep.mubr.bf16.mxu0 0
  %941 = vmatmul.mubr.bf16.gmra.mrb[0].mxu0 %v506
  %v942 = vpop.f32.mrb[0].mxu0
  %v943 = vadd.f32 %v186, %v942
  %v944 = vpop.f32.mrb[0].mxu0
  %v945 = vpop.f32.mrb[0].mxu0
  %v946 = vadd.f32 %v186, %v945
  %v947 = vpop.f32.mrb[0].mxu0
  %948 = vmatprep.mubr.bf16.mxu0 0
  %949 = vmatmul.mubr.bf16.gmra.mrb[0].mxu0 %v507
  %v950 = vpop.f32.mrb[0].mxu0
  %v951 = vadd.f32 %v186, %v950
  %v952 = vpop.f32.mrb[0].mxu0
  %v953 = vpop.f32.mrb[0].mxu0
  %v954 = vadd.f32 %v186, %v953
  %v955 = vpop.f32.mrb[0].mxu0
  %956 = vmatprep.mubr.bf16.mxu0 0
  %957 = vmatmul.mubr.bf16.gmra.mrb[0].mxu0 %v508
  %v958 = vpop.f32.mrb[0].mxu0
  %v959 = vadd.f32 %v186, %v958
  %v960 = vpop.f32.mrb[0].mxu0
  %v961 = vpop.f32.mrb[0].mxu0
  %v962 = vadd.f32 %v186, %v961
  %v963 = vpop.f32.mrb[0].mxu0
  %964 = vmatprep.mubr.bf16.mxu0 0
  %965 = vmatmul.mubr.bf16.gmra.mrb[0].mxu0 %v509
  %v966 = vpop.f32.mrb[0].mxu0
  %v967 = vadd.f32 %v186, %v966
  %v968 = vpop.f32.mrb[0].mxu0
  %v969 = vpop.f32.mrb[0].mxu0
  %v970 = vadd.f32 %v186, %v969
  %v971 = vpop.f32.mrb[0].mxu0
  %972 = vmatprep.mubr.bf16.mxu0 0
  %973 = vmatmul.mubr.bf16.gmra.mrb[0].mxu0 %v510
  %v974 = vpop.f32.mrb[0].mxu0
  %v975 = vadd.f32 %v186, %v974
  %v976 = vpop.f32.mrb[0].mxu0
  %v977 = vpop.f32.mrb[0].mxu0
  %v978 = vadd.f32 %v186, %v977
  %v979 = vpop.f32.mrb[0].mxu0
  %980 = vmatprep.mubr.bf16.mxu0 0
  %981 = vmatmul.mubr.bf16.gmra.mrb[0].mxu0 %v511
  %v982 = vpop.f32.mrb[0].mxu0
  %v983 = vadd.f32 %v186, %v982
  %v984 = vpop.f32.mrb[0].mxu0
  %v985 = vpop.f32.mrb[0].mxu0
  %v986 = vadd.f32 %v186, %v985
  %v987 = vpop.f32.mrb[0].mxu0
  %988 = vmatprep.mubr.bf16.mxu0 0
  %989 = vmatmul.mubr.bf16.gmra.mrb[0].mxu0 %v512
  %v990 = vpop.f32.mrb[0].mxu0
  %v991 = vadd.f32 %v186, %v990
  %v992 = vpop.f32.mrb[0].mxu0
  %v993 = vpop.f32.mrb[0].mxu0
  %v994 = vadd.f32 %v186, %v993
  %v995 = vpop.f32.mrb[0].mxu0
  %996 = vmatprep.mubr.bf16.mxu0 0
  %997 = vmatmul.mubr.bf16.gmra.mrb[0].mxu0 %v513
  %v998 = vpop.f32.mrb[0].mxu0
  %v999 = vadd.f32 %v186, %v998
  %v1000 = vpop.f32.mrb[0].mxu0
  %v1001 = vpop.f32.mrb[0].mxu0
  %v1002 = vadd.f32 %v186, %v1001
  %v1003 = vpop.f32.mrb[0].mxu0
  %1004 = vmatprep.mubr.bf16.mxu0 0
  %1005 = vmatmul.mubr.bf16.gmra.mrb[0].mxu0 %v514
  %v1006 = vpop.f32.mrb[0].mxu0
  %v1007 = vadd.f32 %v186, %v1006
  %v1008 = vpop.f32.mrb[0].mxu0
  %v1009 = vpop.f32.mrb[0].mxu0
  %v1010 = vadd.f32 %v186, %v1009
  %v1011 = vpop.f32.mrb[0].mxu0
  %1012 = vmatprep.mubr.bf16.mxu0 0
  %1013 = vmatmul.mubr.bf16.gmra.mrb[0].mxu0 %v515
  %v1014 = vpop.f32.mrb[0].mxu0
  %v1015 = vadd.f32 %v186, %v1014
  %v1016 = vpop.f32.mrb[0].mxu0
  %v1017 = vpop.f32.mrb[0].mxu0
  %v1018 = vadd.f32 %v186, %v1017
  %v1019 = vpop.f32.mrb[0].mxu0
  %1020 = vmatprep.mubr.bf16.mxu0 0
  %1021 = vmatmul.mubr.bf16.gmra.mrb[0].mxu0 %v516
  %v1022 = vpop.f32.mrb[0].mxu0
  %v1023 = vadd.f32 %v186, %v1022
  %v1024 = vpop.f32.mrb[0].mxu0
  %v1025 = vpop.f32.mrb[0].mxu0
  %v1026 = vadd.f32 %v186, %v1025
  %v1027 = vpop.f32.mrb[0].mxu0
  %1028 = vmatprep.mubr.bf16.mxu0 0
  %1029 = vmatmul.mubr.bf16.gmra.mrb[0].mxu0 %v517
  %v1030 = vpop.f32.mrb[0].mxu0
  %v1031 = vadd.f32 %v186, %v1030
  %v1032 = vpop.f32.mrb[0].mxu0
  %v1033 = vpop.f32.mrb[0].mxu0
  %v1034 = vadd.f32 %v186, %v1033
  %v1035 = vpop.f32.mrb[0].mxu0
  %1036 = vmatprep.mubr.bf16.mxu0 0
  %1037 = vmatmul.mubr.bf16.gmra.mrb[0].mxu0 %v518
  %v1038 = vpop.f32.mrb[0].mxu0
  %v1039 = vadd.f32 %v186, %v1038
  %v1040 = vpop.f32.mrb[0].mxu0
  %v1041 = vpop.f32.mrb[0].mxu0
  %v1042 = vadd.f32 %v186, %v1041
  %v1043 = vpop.f32.mrb[0].mxu0
  %1044 = vmatprep.mubr.bf16.mxu0 0
  %1045 = vmatmul.mubr.bf16.gmra.mrb[0].mxu0 %v519
  %v1046 = vpop.f32.mrb[0].mxu0
  %v1047 = vadd.f32 %v186, %v1046
  %v1048 = vpop.f32.mrb[0].mxu0
  %v1049 = vpop.f32.mrb[0].mxu0
  %v1050 = vadd.f32 %v186, %v1049
  %v1051 = vpop.f32.mrb[0].mxu0
  %1052 = vmatprep.mubr.bf16.mxu0 0
  %1053 = vmatmul.mubr.bf16.gmra.mrb[0].mxu0 %v520
  %v1054 = vpop.f32.mrb[0].mxu0
  %v1055 = vadd.f32 %v186, %v1054
  %v1056 = vpop.f32.mrb[0].mxu0
  %v1057 = vpop.f32.mrb[0].mxu0
  %v1058 = vadd.f32 %v186, %v1057
  %v1059 = vpop.f32.mrb[0].mxu0
  %1060 = vmatprep.mubr.bf16.mxu0 0
  %1061 = vmatmul.mubr.bf16.gmra.mrb[0].mxu0 %v521
  %v1062 = vpop.f32.mrb[0].mxu0
  %v1063 = vadd.f32 %v186, %v1062
  %v1064 = vpop.f32.mrb[0].mxu0
  %v1065 = vpop.f32.mrb[0].mxu0
  %v1066 = vadd.f32 %v186, %v1065
  %v1067 = vpop.f32.mrb[0].mxu0
  %1068 = vmatprep.mubr.bf16.mxu0 0
  %1069 = vmatmul.mubr.bf16.gmra.mrb[0].mxu0 %v522
  %v1070 = vpop.f32.mrb[0].mxu0
  %v1071 = vadd.f32 %v186, %v1070
  %v1072 = vpop.f32.mrb[0].mxu0
  %v1073 = vpop.f32.mrb[0].mxu0
  %v1074 = vadd.f32 %v186, %v1073
  %v1075 = vpop.f32.mrb[0].mxu0
  %1076 = vmatprep.mubr.bf16.mxu0 0
  %1077 = vmatmul.mubr.bf16.gmra.mrb[0].mxu0 %v523
  %v1078 = vpop.f32.mrb[0].mxu0
  %v1079 = vadd.f32 %v186, %v1078
  %v1080 = vpop.f32.mrb[0].mxu0
  %v1081 = vpop.f32.mrb[0].mxu0
  %v1082 = vadd.f32 %v186, %v1081
  %v1083 = vpop.f32.mrb[0].mxu0
  %1084 = vmatprep.mubr.bf16.mxu0 0
  %1085 = vmatmul.mubr.bf16.gmra.mrb[0].mxu0 %v524
  %v1086 = vpop.f32.mrb[0].mxu0
  %v1087 = vadd.f32 %v186, %v1086
  %v1088 = vpop.f32.mrb[0].mxu0
  %v1089 = vpop.f32.mrb[0].mxu0
  %v1090 = vadd.f32 %v186, %v1089
  %v1091 = vpop.f32.mrb[0].mxu0
  %1092 = vmatprep.mubr.bf16.mxu0 0
  %1093 = vmatmul.mubr.bf16.gmra.mrb[0].mxu0 %v525
  %v1094 = vpop.f32.mrb[0].mxu0
  %v1095 = vadd.f32 %v186, %v1094
  %v1096 = vpop.f32.mrb[0].mxu0
  %v1097 = vpop.f32.mrb[0].mxu0
  %v1098 = vadd.f32 %v186, %v1097
  %v1099 = vpop.f32.mrb[0].mxu0
  %1100 = vmatprep.mubr.bf16.mxu0 0
  %1101 = vmatmul.mubr.bf16.gmra.mrb[0].mxu0 %v526
  %v1102 = vpop.f32.mrb[0].mxu0
  %v1103 = vadd.f32 %v186, %v1102
  %v1104 = vpop.f32.mrb[0].mxu0
  %v1105 = vpop.f32.mrb[0].mxu0
  %v1106 = vadd.f32 %v186, %v1105
  %v1107 = vpop.f32.mrb[0].mxu0
  %1108 = vmatprep.mubr.bf16.mxu0 0
  %1109 = vmatmul.mubr.bf16.gmra.mrb[0].mxu0 %v527
  %v1110 = vpop.f32.mrb[0].mxu0
  %v1111 = vadd.f32 %v186, %v1110
  %v1112 = vpop.f32.mrb[0].mxu0
  %v1113 = vpop.f32.mrb[0].mxu0
  %v1114 = vadd.f32 %v186, %v1113
  %v1115 = vpop.f32.mrb[0].mxu0
  %1116 = vmatprep.mubr.bf16.mxu0 0
  %1117 = vmatmul.mubr.bf16.gmra.mrb[0].mxu0 %v528
  %v1118 = vpop.f32.mrb[0].mxu0
  %v1119 = vadd.f32 %v186, %v1118
  %v1120 = vpop.f32.mrb[0].mxu0
  %v1121 = vpop.f32.mrb[0].mxu0
  %v1122 = vadd.f32 %v186, %v1121
  %v1123 = vpop.f32.mrb[0].mxu0
  %1124 = vmatprep.mubr.bf16.mxu0 0
  %1125 = vmatmul.mubr.bf16.gmra.mrb[0].mxu0 %v529
  %v1126 = vpop.f32.mrb[0].mxu0
  %v1127 = vadd.f32 %v186, %v1126
  %v1128 = vpop.f32.mrb[0].mxu0
  %v1129 = vpop.f32.mrb[0].mxu0
  %v1130 = vadd.f32 %v186, %v1129
  %v1131 = vpop.f32.mrb[0].mxu0
  %1132 = vmatprep.mubr.bf16.mxu0 0
  %1133 = vmatmul.mubr.bf16.gmra.mrb[0].mxu0 %v530
  %v1134 = vpop.f32.mrb[0].mxu0
  %v1135 = vadd.f32 %v186, %v1134
  %v1136 = vpop.f32.mrb[0].mxu0
  %v1137 = vpop.f32.mrb[0].mxu0
  %v1138 = vadd.f32 %v186, %v1137
  %v1139 = vpop.f32.mrb[0].mxu0
  %1140 = vmatprep.mubr.bf16.mxu0 0
  %1141 = vmatmul.mubr.bf16.gmra.mrb[0].mxu0 %v531
  %v1142 = vpop.f32.mrb[0].mxu0
  %v1143 = vadd.f32 %v186, %v1142
  %v1144 = vpop.f32.mrb[0].mxu0
  %v1145 = vpop.f32.mrb[0].mxu0
  %v1146 = vadd.f32 %v186, %v1145
  %v1147 = vpop.f32.mrb[0].mxu0
  %1148 = vmatprep.mubr.bf16.mxu0 0
  %1149 = vmatmul.mubr.bf16.gmra.mrb[0].mxu0 %v532
  %v1150 = vpop.f32.mrb[0].mxu0
  %v1151 = vadd.f32 %v186, %v1150
  %v1152 = vpop.f32.mrb[0].mxu0
  %v1153 = vpop.f32.mrb[0].mxu0
  %v1154 = vadd.f32 %v186, %v1153
  %v1155 = vpop.f32.mrb[0].mxu0
  %1156 = vmatprep.mubr.bf16.mxu0 0
  %1157 = vmatmul.mubr.bf16.gmra.mrb[0].mxu0 %v533
  %v1158 = vpop.f32.mrb[0].mxu0
  %v1159 = vadd.f32 %v186, %v1158
  %v1160 = vpop.f32.mrb[0].mxu0
  %v1161 = vpop.f32.mrb[0].mxu0
  %v1162 = vadd.f32 %v186, %v1161
  %v1163 = vpop.f32.mrb[0].mxu0
  %1164 = vmatprep.mubr.bf16.mxu0 0
  %1165 = vmatmul.mubr.bf16.gmra.mrb[0].mxu0 %v534
  %v1166 = vpop.f32.mrb[0].mxu0
  %v1167 = vadd.f32 %v186, %v1166
  %v1168 = vpop.f32.mrb[0].mxu0
  %v1169 = vpop.f32.mrb[0].mxu0
  %v1170 = vadd.f32 %v186, %v1169
  %v1171 = vpop.f32.mrb[0].mxu0
  %1172 = vmatprep.mubr.bf16.mxu0 0
  %1173 = vmatmul.mubr.bf16.gmra.mrb[0].mxu0 %v535
  %v1174 = vpop.f32.mrb[0].mxu0
  %v1175 = vadd.f32 %v186, %v1174
  %v1176 = vpop.f32.mrb[0].mxu0
  %v1177 = vpop.f32.mrb[0].mxu0
  %v1178 = vadd.f32 %v186, %v1177
  %v1179 = vpop.f32.mrb[0].mxu0
  %1180 = vmatprep.mubr.bf16.mxu0 0
  %1181 = vmatmul.mubr.bf16.gmra.mrb[0].mxu0 %v536
  %v1182 = vpop.f32.mrb[0].mxu0
  %v1183 = vadd.f32 %v186, %v1182
  %v1184 = vpop.f32.mrb[0].mxu0
  %v1185 = vpop.f32.mrb[0].mxu0
  %v1186 = vadd.f32 %v186, %v1185
  %v1187 = vpop.f32.mrb[0].mxu0
  %1188 = vmatprep.mubr.bf16.mxu0 0
  %1189 = vmatmul.mubr.bf16.gmra.mrb[0].mxu0 %v537
  %v1190 = vpop.f32.mrb[0].mxu0
  %v1191 = vadd.f32 %v186, %v1190
  %v1192 = vpop.f32.mrb[0].mxu0
  %v1193 = vpop.f32.mrb[0].mxu0
  %v1194 = vadd.f32 %v186, %v1193
  %v1195 = vpop.f32.mrb[0].mxu0
  %1196 = vmatprep.mubr.bf16.mxu0 0
  %1197 = vmatmul.mubr.bf16.gmra.mrb[0].mxu0 %v538
  %v1198 = vpop.f32.mrb[0].mxu0
  %v1199 = vadd.f32 %v186, %v1198
  %v1200 = vpop.f32.mrb[0].mxu0
  %v1201 = vpop.f32.mrb[0].mxu0
  %v1202 = vadd.f32 %v186, %v1201
  %v1203 = vpop.f32.mrb[0].mxu0
  %1204 = vmatprep.mubr.bf16.mxu0 0
  %1205 = vmatmul.mubr.bf16.gmra.mrb[0].mxu0 %v539
  %v1206 = vpop.f32.mrb[0].mxu0
  %v1207 = vadd.f32 %v186, %v1206
  %v1208 = vpop.f32.mrb[0].mxu0
  %v1209 = vpop.f32.mrb[0].mxu0
  %v1210 = vadd.f32 %v186, %v1209
  %v1211 = vpop.f32.mrb[0].mxu0
  %1212 = vmatprep.mubr.bf16.mxu0 0
  %1213 = vmatmul.mubr.bf16.gmra.mrb[0].mxu0 %v540
  %v1214 = vpop.f32.mrb[0].mxu0
  %v1215 = vadd.f32 %v186, %v1214
  %v1216 = vpop.f32.mrb[0].mxu0
  %v1217 = vpop.f32.mrb[0].mxu0
  %v1218 = vadd.f32 %v186, %v1217
  %v1219 = vpop.f32.mrb[0].mxu0
  %1220 = vmatprep.mubr.bf16.mxu0 0
  %1221 = vmatmul.mubr.bf16.gmra.mrb[0].mxu0 %v541
  %v1222 = vpop.f32.mrb[0].mxu0
  %v1223 = vadd.f32 %v186, %v1222
  %v1224 = vpop.f32.mrb[0].mxu0
  %v1225 = vpop.f32.mrb[0].mxu0
  %v1226 = vadd.f32 %v186, %v1225
  %v1227 = vpop.f32.mrb[0].mxu0
  %1228 = vmatprep.mubr.bf16.mxu0 0
  %1229 = vmatmul.mubr.bf16.gmra.mrb[0].mxu0 %v542
  %v1230 = vpop.f32.mrb[0].mxu0
  %v1231 = vadd.f32 %v186, %v1230
  %v1232 = vpop.f32.mrb[0].mxu0
  %v1233 = vpop.f32.mrb[0].mxu0
  %v1234 = vadd.f32 %v186, %v1233
  %v1235 = vpop.f32.mrb[0].mxu0
  %1236 = vmatprep.mubr.bf16.mxu0 0
  %1237 = vmatmul.mubr.bf16.gmra.mrb[0].mxu0 %v543
  %v1238 = vpop.f32.mrb[0].mxu0
  %v1239 = vadd.f32 %v186, %v1238
  %v1240 = vpop.f32.mrb[0].mxu0
  %v1241 = vpop.f32.mrb[0].mxu0
  %v1242 = vadd.f32 %v186, %v1241
  %v1243 = vpop.f32.mrb[0].mxu0
  %1244 = vmatprep.mubr.bf16.mxu0 0
  %1245 = vmatmul.mubr.bf16.gmra.mrb[0].mxu0 %v544
  %v1246 = vpop.f32.mrb[0].mxu0
  %v1247 = vadd.f32 %v186, %v1246
  %v1248 = vpop.f32.mrb[0].mxu0
  %v1249 = vpop.f32.mrb[0].mxu0
  %v1250 = vadd.f32 %v186, %v1249
  %v1251 = vpop.f32.mrb[0].mxu0
  %1252 = vmatprep.mubr.bf16.mxu0 0
  %1253 = vmatmul.mubr.bf16.gmra.mrb[0].mxu0 %v545
  %v1254 = vpop.f32.mrb[0].mxu0
  %v1255 = vadd.f32 %v186, %v1254
  %v1256 = vpop.f32.mrb[0].mxu0
  %v1257 = vpop.f32.mrb[0].mxu0
  %v1258 = vadd.f32 %v186, %v1257
  %v1259 = vpop.f32.mrb[0].mxu0
  %1260 = vmatprep.mubr.bf16.mxu0 0
  %1261 = vmatmul.mubr.bf16.gmra.mrb[0].mxu0 %v546
  %v1262 = vpop.f32.mrb[0].mxu0
  %v1263 = vadd.f32 %v186, %v1262
  %v1264 = vpop.f32.mrb[0].mxu0
  %v1265 = vpop.f32.mrb[0].mxu0
  %v1266 = vadd.f32 %v186, %v1265
  %v1267 = vpop.f32.mrb[0].mxu0
  %1268 = vmatprep.mubr.bf16.mxu0 0
  %1269 = vmatmul.mubr.bf16.gmra.mrb[0].mxu0 %v547
  %v1270 = vpop.f32.mrb[0].mxu0
  %v1271 = vadd.f32 %v186, %v1270
  %v1272 = vpop.f32.mrb[0].mxu0
  %v1273 = vpop.f32.mrb[0].mxu0
  %v1274 = vadd.f32 %v186, %v1273
  %v1275 = vpop.f32.mrb[0].mxu0
  %1276 = vdwg.mxu0
  %v1277 = vadd.f32 %v703, %v706
  %v1278 = vadd.f32 %v1277, %v711
  %v1279 = vadd.f32 %v1278, %v714
  %v1280 = vadd.f32 %v1279, %v719
  %v1281 = vadd.f32 %v1280, %v722
  %v1282 = vadd.f32 %v1281, %v727
  %v1283 = vadd.f32 %v1282, %v730
  %v1284 = vadd.f32 %v1283, %v735
  %v1285 = vadd.f32 %v1284, %v738
  %v1286 = vadd.f32 %v1285, %v743
  %v1287 = vadd.f32 %v1286, %v746
  %v1288 = vadd.f32 %v1287, %v751
  %v1289 = vadd.f32 %v1288, %v754
  %v1290 = vadd.f32 %v1289, %v759
  %v1291 = vadd.f32 %v1290, %v762
  %v1292 = vadd.f32 %v1291, %v767
  %v1293 = vadd.f32 %v1292, %v770
  %v1294 = vadd.f32 %v1293, %v775
  %v1295 = vadd.f32 %v1294, %v778
  %v1296 = vadd.f32 %v1295, %v783
  %v1297 = vadd.f32 %v1296, %v786
  %v1298 = vadd.f32 %v1297, %v791
  %v1299 = vadd.f32 %v1298, %v794
  %v1300 = vadd.f32 %v1299, %v799
  %v1301 = vadd.f32 %v1300, %v802
  %v1302 = vadd.f32 %v1301, %v807
  %v1303 = vadd.f32 %v1302, %v810
  %v1304 = vadd.f32 %v1303, %v815
  %v1305 = vadd.f32 %v1304, %v818
  %v1306 = vadd.f32 %v1305, %v823
  %v1307 = vadd.f32 %v1306, %v826
  %v1308 = vadd.f32 %v1307, %v831
  %v1309 = vadd.f32 %v1308, %v834
  %v1310 = vadd.f32 %v1309, %v839
  %v1311 = vadd.f32 %v1310, %v842
  %v1312 = vadd.f32 %v1311, %v847
  %v1313 = vadd.f32 %v1312, %v850
  %v1314 = vadd.f32 %v1313, %v855
  %v1315 = vadd.f32 %v1314, %v858
  %v1316 = vadd.f32 %v1315, %v863
  %v1317 = vadd.f32 %v1316, %v866
  %v1318 = vadd.f32 %v1317, %v871
  %v1319 = vadd.f32 %v1318, %v874
  %v1320 = vadd.f32 %v1319, %v879
  %v1321 = vadd.f32 %v1320, %v882
  %v1322 = vadd.f32 %v1321, %v887
  %v1323 = vadd.f32 %v1322, %v890
  %v1324 = vadd.f32 %v1323, %v895
  %v1325 = vadd.f32 %v1324, %v898
  %v1326 = vadd.f32 %v1325, %v903
  %v1327 = vadd.f32 %v1326, %v906
  %v1328 = vadd.f32 %v1327, %v911
  %v1329 = vadd.f32 %v1328, %v914
  %v1330 = vadd.f32 %v1329, %v919
  %v1331 = vadd.f32 %v1330, %v922
  %v1332 = vadd.f32 %v1331, %v927
  %v1333 = vadd.f32 %v1332, %v930
  %v1334 = vadd.f32 %v1333, %v935
  %v1335 = vadd.f32 %v1334, %v938
  %v1336 = vadd.f32 %v1335, %v943
  %v1337 = vadd.f32 %v1336, %v946
  %v1338 = vadd.f32 %v1337, %v951
  %v1339 = vadd.f32 %v1338, %v954
  %v1340 = vadd.f32 %v1339, %v959
  %v1341 = vadd.f32 %v1340, %v962
  %v1342 = vadd.f32 %v1341, %v967
  %v1343 = vadd.f32 %v1342, %v970
  %v1344 = vadd.f32 %v1343, %v975
  %v1345 = vadd.f32 %v1344, %v978
  %v1346 = vadd.f32 %v1345, %v983
  %v1347 = vadd.f32 %v1346, %v986
  %v1348 = vadd.f32 %v1347, %v991
  %v1349 = vadd.f32 %v1348, %v994
  %v1350 = vadd.f32 %v1349, %v999
  %v1351 = vadd.f32 %v1350, %v1002
  %v1352 = vadd.f32 %v1351, %v1007
  %v1353 = vadd.f32 %v1352, %v1010
  %v1354 = vadd.f32 %v1353, %v1015
  %v1355 = vadd.f32 %v1354, %v1018
  %v1356 = vadd.f32 %v1355, %v1023
  %v1357 = vadd.f32 %v1356, %v1026
  %v1358 = vadd.f32 %v1357, %v1031
  %v1359 = vadd.f32 %v1358, %v1034
  %v1360 = vadd.f32 %v1359, %v1039
  %v1361 = vadd.f32 %v1360, %v1042
  %v1362 = vadd.f32 %v1361, %v1047
  %v1363 = vadd.f32 %v1362, %v1050
  %v1364 = vadd.f32 %v1363, %v1055
  %v1365 = vadd.f32 %v1364, %v1058
  %v1366 = vadd.f32 %v1365, %v1063
  %v1367 = vadd.f32 %v1366, %v1066
  %v1368 = vadd.f32 %v1367, %v1071
  %v1369 = vadd.f32 %v1368, %v1074
  %v1370 = vadd.f32 %v1369, %v1079
  %v1371 = vadd.f32 %v1370, %v1082
  %v1372 = vadd.f32 %v1371, %v1087
  %v1373 = vadd.f32 %v1372, %v1090
  %v1374 = vadd.f32 %v1373, %v1095
  %v1375 = vadd.f32 %v1374, %v1098
  %v1376 = vadd.f32 %v1375, %v1103
  %v1377 = vadd.f32 %v1376, %v1106
  %v1378 = vadd.f32 %v1377, %v1111
  %v1379 = vadd.f32 %v1378, %v1114
  %v1380 = vadd.f32 %v1379, %v1119
  %v1381 = vadd.f32 %v1380, %v1122
  %v1382 = vadd.f32 %v1381, %v1127
  %v1383 = vadd.f32 %v1382, %v1130
  %v1384 = vadd.f32 %v1383, %v1135
  %v1385 = vadd.f32 %v1384, %v1138
  %v1386 = vadd.f32 %v1385, %v1143
  %v1387 = vadd.f32 %v1386, %v1146
  %v1388 = vadd.f32 %v1387, %v1151
  %v1389 = vadd.f32 %v1388, %v1154
  %v1390 = vadd.f32 %v1389, %v1159
  %v1391 = vadd.f32 %v1390, %v1162
  %v1392 = vadd.f32 %v1391, %v1167
  %v1393 = vadd.f32 %v1392, %v1170
  %v1394 = vadd.f32 %v1393, %v1175
  %v1395 = vadd.f32 %v1394, %v1178
  %v1396 = vadd.f32 %v1395, %v1183
  %v1397 = vadd.f32 %v1396, %v1186
  %v1398 = vadd.f32 %v1397, %v1191
  %v1399 = vadd.f32 %v1398, %v1194
  %v1400 = vadd.f32 %v1399, %v1199
  %v1401 = vadd.f32 %v1400, %v1202
  %v1402 = vadd.f32 %v1401, %v1207
  %v1403 = vadd.f32 %v1402, %v1210
  %v1404 = vadd.f32 %v1403, %v1215
  %v1405 = vadd.f32 %v1404, %v1218
  %v1406 = vadd.f32 %v1405, %v1223
  %v1407 = vadd.f32 %v1406, %v1226
  %v1408 = vadd.f32 %v1407, %v1231
  %v1409 = vadd.f32 %v1408, %v1234
  %v1410 = vadd.f32 %v1409, %v1239
  %v1411 = vadd.f32 %v1410, %v1242
  %v1412 = vadd.f32 %v1411, %v1247
  %v1413 = vadd.f32 %v1412, %v1250
  %v1414 = vadd.f32 %v1413, %v1255
  %v1415 = vadd.f32 %v1414, %v1258
  %v1416 = vadd.f32 %v1415, %v1263
  %v1417 = vadd.f32 %v1416, %v1266
  %v1418 = vadd.f32 %v1417, %v1271
  %v1419 = vadd.f32 %v1418, %v1274
  %v1420 = vrot.slane %v1419, 4
  %v1421 = vadd.f32 %v1419, %v1420
  %v1422 = vrot.slane %v1421, 2
  %v1423 = vadd.f32 %v1421, %v1422
  %v1424 = vrot.slane %v1423, 1
  %v1425 = vadd.f32 %v1423, %v1424
  %v1426 = vmul.f32 %v1425, 0.00086805556
  %v1427 = vmul.f32 %v703, %v703
  %v1428 = vmul.f32 %v706, %v706
  %v1429 = vmul.f32 %v711, %v711
  %v1430 = vmul.f32 %v714, %v714
  %v1431 = vmul.f32 %v719, %v719
  %v1432 = vmul.f32 %v722, %v722
  %v1433 = vmul.f32 %v727, %v727
  %v1434 = vmul.f32 %v730, %v730
  %v1435 = vmul.f32 %v735, %v735
  %v1436 = vmul.f32 %v738, %v738
  %v1437 = vmul.f32 %v743, %v743
  %v1438 = vmul.f32 %v746, %v746
  %v1439 = vmul.f32 %v751, %v751
  %v1440 = vmul.f32 %v754, %v754
  %v1441 = vmul.f32 %v759, %v759
  %v1442 = vmul.f32 %v762, %v762
  %v1443 = vmul.f32 %v767, %v767
  %v1444 = vmul.f32 %v770, %v770
  %v1445 = vmul.f32 %v775, %v775
  %v1446 = vmul.f32 %v778, %v778
  %v1447 = vmul.f32 %v783, %v783
  %v1448 = vmul.f32 %v786, %v786
  %v1449 = vmul.f32 %v791, %v791
  %v1450 = vmul.f32 %v794, %v794
  %v1451 = vmul.f32 %v799, %v799
  %v1452 = vmul.f32 %v802, %v802
  %v1453 = vmul.f32 %v807, %v807
  %v1454 = vmul.f32 %v810, %v810
  %v1455 = vmul.f32 %v815, %v815
  %v1456 = vmul.f32 %v818, %v818
  %v1457 = vmul.f32 %v823, %v823
  %v1458 = vmul.f32 %v826, %v826
  %v1459 = vmul.f32 %v831, %v831
  %v1460 = vmul.f32 %v834, %v834
  %v1461 = vmul.f32 %v839, %v839
  %v1462 = vmul.f32 %v842, %v842
  %v1463 = vmul.f32 %v847, %v847
  %v1464 = vmul.f32 %v850, %v850
  %v1465 = vmul.f32 %v855, %v855
  %v1466 = vmul.f32 %v858, %v858
  %v1467 = vmul.f32 %v863, %v863
  %v1468 = vmul.f32 %v866, %v866
  %v1469 = vmul.f32 %v871, %v871
  %v1470 = vmul.f32 %v874, %v874
  %v1471 = vmul.f32 %v879, %v879
  %v1472 = vmul.f32 %v882, %v882
  %v1473 = vmul.f32 %v887, %v887
  %v1474 = vmul.f32 %v890, %v890
  %v1475 = vmul.f32 %v895, %v895
  %v1476 = vmul.f32 %v898, %v898
  %v1477 = vmul.f32 %v903, %v903
  %v1478 = vmul.f32 %v906, %v906
  %v1479 = vmul.f32 %v911, %v911
  %v1480 = vmul.f32 %v914, %v914
  %v1481 = vmul.f32 %v919, %v919
  %v1482 = vmul.f32 %v922, %v922
  %v1483 = vmul.f32 %v927, %v927
  %v1484 = vmul.f32 %v930, %v930
  %v1485 = vmul.f32 %v935, %v935
  %v1486 = vmul.f32 %v938, %v938
  %v1487 = vmul.f32 %v943, %v943
  %v1488 = vmul.f32 %v946, %v946
  %v1489 = vmul.f32 %v951, %v951
  %v1490 = vmul.f32 %v954, %v954
  %v1491 = vmul.f32 %v959, %v959
  %v1492 = vmul.f32 %v962, %v962
  %v1493 = vmul.f32 %v967, %v967
  %v1494 = vmul.f32 %v970, %v970
  %v1495 = vmul.f32 %v975, %v975
  %v1496 = vmul.f32 %v978, %v978
  %v1497 = vmul.f32 %v983, %v983
  %v1498 = vmul.f32 %v986, %v986
  %v1499 = vmul.f32 %v991, %v991
  %v1500 = vmul.f32 %v994, %v994
  %v1501 = vmul.f32 %v999, %v999
  %v1502 = vmul.f32 %v1002, %v1002
  %v1503 = vmul.f32 %v1007, %v1007
  %v1504 = vmul.f32 %v1010, %v1010
  %v1505 = vmul.f32 %v1015, %v1015
  %v1506 = vmul.f32 %v1018, %v1018
  %v1507 = vmul.f32 %v1023, %v1023
  %v1508 = vmul.f32 %v1026, %v1026
  %v1509 = vmul.f32 %v1031, %v1031
  %v1510 = vmul.f32 %v1034, %v1034
  %v1511 = vmul.f32 %v1039, %v1039
  %v1512 = vmul.f32 %v1042, %v1042
  %v1513 = vmul.f32 %v1047, %v1047
  %v1514 = vmul.f32 %v1050, %v1050
  %v1515 = vmul.f32 %v1055, %v1055
  %v1516 = vmul.f32 %v1058, %v1058
  %v1517 = vmul.f32 %v1063, %v1063
  %v1518 = vmul.f32 %v1066, %v1066
  %v1519 = vmul.f32 %v1071, %v1071
  %v1520 = vmul.f32 %v1074, %v1074
  %v1521 = vmul.f32 %v1079, %v1079
  %v1522 = vmul.f32 %v1082, %v1082
  %v1523 = vmul.f32 %v1087, %v1087
  %v1524 = vmul.f32 %v1090, %v1090
  %v1525 = vmul.f32 %v1095, %v1095
  %v1526 = vmul.f32 %v1098, %v1098
  %v1527 = vmul.f32 %v1103, %v1103
  %v1528 = vmul.f32 %v1106, %v1106
  %v1529 = vmul.f32 %v1111, %v1111
  %v1530 = vmul.f32 %v1114, %v1114
  %v1531 = vmul.f32 %v1119, %v1119
  %v1532 = vmul.f32 %v1122, %v1122
  %v1533 = vmul.f32 %v1127, %v1127
  %v1534 = vmul.f32 %v1130, %v1130
  %v1535 = vmul.f32 %v1135, %v1135
  %v1536 = vmul.f32 %v1138, %v1138
  %v1537 = vmul.f32 %v1143, %v1143
  %v1538 = vmul.f32 %v1146, %v1146
  %v1539 = vmul.f32 %v1151, %v1151
  %v1540 = vmul.f32 %v1154, %v1154
  %v1541 = vmul.f32 %v1159, %v1159
  %v1542 = vmul.f32 %v1162, %v1162
  %v1543 = vmul.f32 %v1167, %v1167
  %v1544 = vmul.f32 %v1170, %v1170
  %v1545 = vmul.f32 %v1175, %v1175
  %v1546 = vmul.f32 %v1178, %v1178
  %v1547 = vmul.f32 %v1183, %v1183
  %v1548 = vmul.f32 %v1186, %v1186
  %v1549 = vmul.f32 %v1191, %v1191
  %v1550 = vmul.f32 %v1194, %v1194
  %v1551 = vmul.f32 %v1199, %v1199
  %v1552 = vmul.f32 %v1202, %v1202
  %v1553 = vmul.f32 %v1207, %v1207
  %v1554 = vmul.f32 %v1210, %v1210
  %v1555 = vmul.f32 %v1215, %v1215
  %v1556 = vmul.f32 %v1218, %v1218
  %v1557 = vmul.f32 %v1223, %v1223
  %v1558 = vmul.f32 %v1226, %v1226
  %v1559 = vmul.f32 %v1231, %v1231
  %v1560 = vmul.f32 %v1234, %v1234
  %v1561 = vmul.f32 %v1239, %v1239
  %v1562 = vmul.f32 %v1242, %v1242
  %v1563 = vmul.f32 %v1247, %v1247
  %v1564 = vmul.f32 %v1250, %v1250
  %v1565 = vmul.f32 %v1255, %v1255
  %v1566 = vmul.f32 %v1258, %v1258
  %v1567 = vmul.f32 %v1263, %v1263
  %v1568 = vmul.f32 %v1266, %v1266
  %v1569 = vmul.f32 %v1271, %v1271
  %v1570 = vmul.f32 %v1274, %v1274
  %v1571 = vadd.f32 %v1427, %v1428
  %v1572 = vadd.f32 %v1571, %v1429
  %v1573 = vadd.f32 %v1572, %v1430
  %v1574 = vadd.f32 %v1573, %v1431
  %v1575 = vadd.f32 %v1574, %v1432
  %v1576 = vadd.f32 %v1575, %v1433
  %v1577 = vadd.f32 %v1576, %v1434
  %v1578 = vadd.f32 %v1577, %v1435
  %v1579 = vadd.f32 %v1578, %v1436
  %v1580 = vadd.f32 %v1579, %v1437
  %v1581 = vadd.f32 %v1580, %v1438
  %v1582 = vadd.f32 %v1581, %v1439
  %v1583 = vadd.f32 %v1582, %v1440
  %v1584 = vadd.f32 %v1583, %v1441
  %v1585 = vadd.f32 %v1584, %v1442
  %v1586 = vadd.f32 %v1585, %v1443
  %v1587 = vadd.f32 %v1586, %v1444
  %v1588 = vadd.f32 %v1587, %v1445
  %v1589 = vadd.f32 %v1588, %v1446
  %v1590 = vadd.f32 %v1589, %v1447
  %v1591 = vadd.f32 %v1590, %v1448
  %v1592 = vadd.f32 %v1591, %v1449
  %v1593 = vadd.f32 %v1592, %v1450
  %v1594 = vadd.f32 %v1593, %v1451
  %v1595 = vadd.f32 %v1594, %v1452
  %v1596 = vadd.f32 %v1595, %v1453
  %v1597 = vadd.f32 %v1596, %v1454
  %v1598 = vadd.f32 %v1597, %v1455
  %v1599 = vadd.f32 %v1598, %v1456
  %v1600 = vadd.f32 %v1599, %v1457
  %v1601 = vadd.f32 %v1600, %v1458
  %v1602 = vadd.f32 %v1601, %v1459
  %v1603 = vadd.f32 %v1602, %v1460
  %v1604 = vadd.f32 %v1603, %v1461
  %v1605 = vadd.f32 %v1604, %v1462
  %v1606 = vadd.f32 %v1605, %v1463
  %v1607 = vadd.f32 %v1606, %v1464
  %v1608 = vadd.f32 %v1607, %v1465
  %v1609 = vadd.f32 %v1608, %v1466
  %v1610 = vadd.f32 %v1609, %v1467
  %v1611 = vadd.f32 %v1610, %v1468
  %v1612 = vadd.f32 %v1611, %v1469
  %v1613 = vadd.f32 %v1612, %v1470
  %v1614 = vadd.f32 %v1613, %v1471
  %v1615 = vadd.f32 %v1614, %v1472
  %v1616 = vadd.f32 %v1615, %v1473
  %v1617 = vadd.f32 %v1616, %v1474
  %v1618 = vadd.f32 %v1617, %v1475
  %v1619 = vadd.f32 %v1618, %v1476
  %v1620 = vadd.f32 %v1619, %v1477
  %v1621 = vadd.f32 %v1620, %v1478
  %v1622 = vadd.f32 %v1621, %v1479
  %v1623 = vadd.f32 %v1622, %v1480
  %v1624 = vadd.f32 %v1623, %v1481
  %v1625 = vadd.f32 %v1624, %v1482
  %v1626 = vadd.f32 %v1625, %v1483
  %v1627 = vadd.f32 %v1626, %v1484
  %v1628 = vadd.f32 %v1627, %v1485
  %v1629 = vadd.f32 %v1628, %v1486
  %v1630 = vadd.f32 %v1629, %v1487
  %v1631 = vadd.f32 %v1630, %v1488
  %v1632 = vadd.f32 %v1631, %v1489
  %v1633 = vadd.f32 %v1632, %v1490
  %v1634 = vadd.f32 %v1633, %v1491
  %v1635 = vadd.f32 %v1634, %v1492
  %v1636 = vadd.f32 %v1635, %v1493
  %v1637 = vadd.f32 %v1636, %v1494
  %v1638 = vadd.f32 %v1637, %v1495
  %v1639 = vadd.f32 %v1638, %v1496
  %v1640 = vadd.f32 %v1639, %v1497
  %v1641 = vadd.f32 %v1640, %v1498
  %v1642 = vadd.f32 %v1641, %v1499
  %v1643 = vadd.f32 %v1642, %v1500
  %v1644 = vadd.f32 %v1643, %v1501
  %v1645 = vadd.f32 %v1644, %v1502
  %v1646 = vadd.f32 %v1645, %v1503
  %v1647 = vadd.f32 %v1646, %v1504
  %v1648 = vadd.f32 %v1647, %v1505
  %v1649 = vadd.f32 %v1648, %v1506
  %v1650 = vadd.f32 %v1649, %v1507
  %v1651 = vadd.f32 %v1650, %v1508
  %v1652 = vadd.f32 %v1651, %v1509
  %v1653 = vadd.f32 %v1652, %v1510
  %v1654 = vadd.f32 %v1653, %v1511
  %v1655 = vadd.f32 %v1654, %v1512
  %v1656 = vadd.f32 %v1655, %v1513
  %v1657 = vadd.f32 %v1656, %v1514
  %v1658 = vadd.f32 %v1657, %v1515
  %v1659 = vadd.f32 %v1658, %v1516
  %v1660 = vadd.f32 %v1659, %v1517
  %v1661 = vadd.f32 %v1660, %v1518
  %v1662 = vadd.f32 %v1661, %v1519
  %v1663 = vadd.f32 %v1662, %v1520
  %v1664 = vadd.f32 %v1663, %v1521
  %v1665 = vadd.f32 %v1664, %v1522
  %v1666 = vadd.f32 %v1665, %v1523
  %v1667 = vadd.f32 %v1666, %v1524
  %v1668 = vadd.f32 %v1667, %v1525
  %v1669 = vadd.f32 %v1668, %v1526
  %v1670 = vadd.f32 %v1669, %v1527
  %v1671 = vadd.f32 %v1670, %v1528
  %v1672 = vadd.f32 %v1671, %v1529
  %v1673 = vadd.f32 %v1672, %v1530
  %v1674 = vadd.f32 %v1673, %v1531
  %v1675 = vadd.f32 %v1674, %v1532
  %v1676 = vadd.f32 %v1675, %v1533
  %v1677 = vadd.f32 %v1676, %v1534
  %v1678 = vadd.f32 %v1677, %v1535
  %v1679 = vadd.f32 %v1678, %v1536
  %v1680 = vadd.f32 %v1679, %v1537
  %v1681 = vadd.f32 %v1680, %v1538
  %v1682 = vadd.f32 %v1681, %v1539
  %v1683 = vadd.f32 %v1682, %v1540
  %v1684 = vadd.f32 %v1683, %v1541
  %v1685 = vadd.f32 %v1684, %v1542
  %v1686 = vadd.f32 %v1685, %v1543
  %v1687 = vadd.f32 %v1686, %v1544
  %v1688 = vadd.f32 %v1687, %v1545
  %v1689 = vadd.f32 %v1688, %v1546
  %v1690 = vadd.f32 %v1689, %v1547
  %v1691 = vadd.f32 %v1690, %v1548
  %v1692 = vadd.f32 %v1691, %v1549
  %v1693 = vadd.f32 %v1692, %v1550
  %v1694 = vadd.f32 %v1693, %v1551
  %v1695 = vadd.f32 %v1694, %v1552
  %v1696 = vadd.f32 %v1695, %v1553
  %v1697 = vadd.f32 %v1696, %v1554
  %v1698 = vadd.f32 %v1697, %v1555
  %v1699 = vadd.f32 %v1698, %v1556
  %v1700 = vadd.f32 %v1699, %v1557
  %v1701 = vadd.f32 %v1700, %v1558
  %v1702 = vadd.f32 %v1701, %v1559
  %v1703 = vadd.f32 %v1702, %v1560
  %v1704 = vadd.f32 %v1703, %v1561
  %v1705 = vadd.f32 %v1704, %v1562
  %v1706 = vadd.f32 %v1705, %v1563
  %v1707 = vadd.f32 %v1706, %v1564
  %v1708 = vadd.f32 %v1707, %v1565
  %v1709 = vadd.f32 %v1708, %v1566
  %v1710 = vadd.f32 %v1709, %v1567
  %v1711 = vadd.f32 %v1710, %v1568
  %v1712 = vadd.f32 %v1711, %v1569
  %v1713 = vadd.f32 %v1712, %v1570
  %v1714 = vrot.slane %v1713, 4
  %v1715 = vadd.f32 %v1713, %v1714
  %v1716 = vrot.slane %v1715, 2
  %v1717 = vadd.f32 %v1715, %v1716
  %v1718 = vrot.slane %v1717, 1
  %v1719 = vadd.f32 %v1717, %v1718
  %v1720 = vmul.f32 %v1719, 0.00086805556
  %v1721 = vmul.f32 %v1426, %v1426
  %v1722 = vsub.f32 %v1720, %v1721
  %v1723 = vmax.f32 %v1722, 0.0
  %v1724 = vadd.f32 %v1723, 1e-05
  %v1725 = vrsqrt.pop %v1724
  %v1726 = vsub.f32 %v703, %v1426
  %v1727 = vsub.f32 %v706, %v1426
  %v1728 = vsub.f32 %v711, %v1426
  %v1729 = vsub.f32 %v714, %v1426
  %v1730 = vsub.f32 %v719, %v1426
  %v1731 = vsub.f32 %v722, %v1426
  %v1732 = vsub.f32 %v727, %v1426
  %v1733 = vsub.f32 %v730, %v1426
  %v1734 = vsub.f32 %v735, %v1426
  %v1735 = vsub.f32 %v738, %v1426
  %v1736 = vsub.f32 %v743, %v1426
  %v1737 = vsub.f32 %v746, %v1426
  %v1738 = vsub.f32 %v751, %v1426
  %v1739 = vsub.f32 %v754, %v1426
  %v1740 = vsub.f32 %v759, %v1426
  %v1741 = vsub.f32 %v762, %v1426
  %v1742 = vsub.f32 %v767, %v1426
  %v1743 = vsub.f32 %v770, %v1426
  %v1744 = vsub.f32 %v775, %v1426
  %v1745 = vsub.f32 %v778, %v1426
  %v1746 = vsub.f32 %v783, %v1426
  %v1747 = vsub.f32 %v786, %v1426
  %v1748 = vsub.f32 %v791, %v1426
  %v1749 = vsub.f32 %v794, %v1426
  %v1750 = vsub.f32 %v799, %v1426
  %v1751 = vsub.f32 %v802, %v1426
  %v1752 = vsub.f32 %v807, %v1426
  %v1753 = vsub.f32 %v810, %v1426
  %v1754 = vsub.f32 %v815, %v1426
  %v1755 = vsub.f32 %v818, %v1426
  %v1756 = vsub.f32 %v823, %v1426
  %v1757 = vsub.f32 %v826, %v1426
  %v1758 = vsub.f32 %v831, %v1426
  %v1759 = vsub.f32 %v834, %v1426
  %v1760 = vsub.f32 %v839, %v1426
  %v1761 = vsub.f32 %v842, %v1426
  %v1762 = vsub.f32 %v847, %v1426
  %v1763 = vsub.f32 %v850, %v1426
  %v1764 = vsub.f32 %v855, %v1426
  %v1765 = vsub.f32 %v858, %v1426
  %v1766 = vsub.f32 %v863, %v1426
  %v1767 = vsub.f32 %v866, %v1426
  %v1768 = vsub.f32 %v871, %v1426
  %v1769 = vsub.f32 %v874, %v1426
  %v1770 = vsub.f32 %v879, %v1426
  %v1771 = vsub.f32 %v882, %v1426
  %v1772 = vsub.f32 %v887, %v1426
  %v1773 = vsub.f32 %v890, %v1426
  %v1774 = vsub.f32 %v895, %v1426
  %v1775 = vsub.f32 %v898, %v1426
  %v1776 = vsub.f32 %v903, %v1426
  %v1777 = vsub.f32 %v906, %v1426
  %v1778 = vsub.f32 %v911, %v1426
  %v1779 = vsub.f32 %v914, %v1426
  %v1780 = vsub.f32 %v919, %v1426
  %v1781 = vsub.f32 %v922, %v1426
  %v1782 = vsub.f32 %v927, %v1426
  %v1783 = vsub.f32 %v930, %v1426
  %v1784 = vsub.f32 %v935, %v1426
  %v1785 = vsub.f32 %v938, %v1426
  %v1786 = vsub.f32 %v943, %v1426
  %v1787 = vsub.f32 %v946, %v1426
  %v1788 = vsub.f32 %v951, %v1426
  %v1789 = vsub.f32 %v954, %v1426
  %v1790 = vsub.f32 %v959, %v1426
  %v1791 = vsub.f32 %v962, %v1426
  %v1792 = vsub.f32 %v967, %v1426
  %v1793 = vsub.f32 %v970, %v1426
  %v1794 = vsub.f32 %v975, %v1426
  %v1795 = vsub.f32 %v978, %v1426
  %v1796 = vsub.f32 %v983, %v1426
  %v1797 = vsub.f32 %v986, %v1426
  %v1798 = vsub.f32 %v991, %v1426
  %v1799 = vsub.f32 %v994, %v1426
  %v1800 = vsub.f32 %v999, %v1426
  %v1801 = vsub.f32 %v1002, %v1426
  %v1802 = vsub.f32 %v1007, %v1426
  %v1803 = vsub.f32 %v1010, %v1426
  %v1804 = vsub.f32 %v1015, %v1426
  %v1805 = vsub.f32 %v1018, %v1426
  %v1806 = vsub.f32 %v1023, %v1426
  %v1807 = vsub.f32 %v1026, %v1426
  %v1808 = vsub.f32 %v1031, %v1426
  %v1809 = vsub.f32 %v1034, %v1426
  %v1810 = vsub.f32 %v1039, %v1426
  %v1811 = vsub.f32 %v1042, %v1426
  %v1812 = vsub.f32 %v1047, %v1426
  %v1813 = vsub.f32 %v1050, %v1426
  %v1814 = vsub.f32 %v1055, %v1426
  %v1815 = vsub.f32 %v1058, %v1426
  %v1816 = vsub.f32 %v1063, %v1426
  %v1817 = vsub.f32 %v1066, %v1426
  %v1818 = vsub.f32 %v1071, %v1426
  %v1819 = vsub.f32 %v1074, %v1426
  %v1820 = vsub.f32 %v1079, %v1426
  %v1821 = vsub.f32 %v1082, %v1426
  %v1822 = vsub.f32 %v1087, %v1426
  %v1823 = vsub.f32 %v1090, %v1426
  %v1824 = vsub.f32 %v1095, %v1426
  %v1825 = vsub.f32 %v1098, %v1426
  %v1826 = vsub.f32 %v1103, %v1426
  %v1827 = vsub.f32 %v1106, %v1426
  %v1828 = vsub.f32 %v1111, %v1426
  %v1829 = vsub.f32 %v1114, %v1426
  %v1830 = vsub.f32 %v1119, %v1426
  %v1831 = vsub.f32 %v1122, %v1426
  %v1832 = vsub.f32 %v1127, %v1426
  %v1833 = vsub.f32 %v1130, %v1426
  %v1834 = vsub.f32 %v1135, %v1426
  %v1835 = vsub.f32 %v1138, %v1426
  %v1836 = vsub.f32 %v1143, %v1426
  %v1837 = vsub.f32 %v1146, %v1426
  %v1838 = vsub.f32 %v1151, %v1426
  %v1839 = vsub.f32 %v1154, %v1426
  %v1840 = vsub.f32 %v1159, %v1426
  %v1841 = vsub.f32 %v1162, %v1426
  %v1842 = vsub.f32 %v1167, %v1426
  %v1843 = vsub.f32 %v1170, %v1426
  %v1844 = vsub.f32 %v1175, %v1426
  %v1845 = vsub.f32 %v1178, %v1426
  %v1846 = vsub.f32 %v1183, %v1426
  %v1847 = vsub.f32 %v1186, %v1426
  %v1848 = vsub.f32 %v1191, %v1426
  %v1849 = vsub.f32 %v1194, %v1426
  %v1850 = vsub.f32 %v1199, %v1426
  %v1851 = vsub.f32 %v1202, %v1426
  %v1852 = vsub.f32 %v1207, %v1426
  %v1853 = vsub.f32 %v1210, %v1426
  %v1854 = vsub.f32 %v1215, %v1426
  %v1855 = vsub.f32 %v1218, %v1426
  %v1856 = vsub.f32 %v1223, %v1426
  %v1857 = vsub.f32 %v1226, %v1426
  %v1858 = vsub.f32 %v1231, %v1426
  %v1859 = vsub.f32 %v1234, %v1426
  %v1860 = vsub.f32 %v1239, %v1426
  %v1861 = vsub.f32 %v1242, %v1426
  %v1862 = vsub.f32 %v1247, %v1426
  %v1863 = vsub.f32 %v1250, %v1426
  %v1864 = vsub.f32 %v1255, %v1426
  %v1865 = vsub.f32 %v1258, %v1426
  %v1866 = vsub.f32 %v1263, %v1426
  %v1867 = vsub.f32 %v1266, %v1426
  %v1868 = vsub.f32 %v1271, %v1426
  %v1869 = vsub.f32 %v1274, %v1426
  %v1870 = vmul.f32 %v1726, %v1725
  %v1871 = vmul.f32 %v1727, %v1725
  %v1872 = vmul.f32 %v1728, %v1725
  %v1873 = vmul.f32 %v1729, %v1725
  %v1874 = vmul.f32 %v1730, %v1725
  %v1875 = vmul.f32 %v1731, %v1725
  %v1876 = vmul.f32 %v1732, %v1725
  %v1877 = vmul.f32 %v1733, %v1725
  %v1878 = vmul.f32 %v1734, %v1725
  %v1879 = vmul.f32 %v1735, %v1725
  %v1880 = vmul.f32 %v1736, %v1725
  %v1881 = vmul.f32 %v1737, %v1725
  %v1882 = vmul.f32 %v1738, %v1725
  %v1883 = vmul.f32 %v1739, %v1725
  %v1884 = vmul.f32 %v1740, %v1725
  %v1885 = vmul.f32 %v1741, %v1725
  %v1886 = vmul.f32 %v1742, %v1725
  %v1887 = vmul.f32 %v1743, %v1725
  %v1888 = vmul.f32 %v1744, %v1725
  %v1889 = vmul.f32 %v1745, %v1725
  %v1890 = vmul.f32 %v1746, %v1725
  %v1891 = vmul.f32 %v1747, %v1725
  %v1892 = vmul.f32 %v1748, %v1725
  %v1893 = vmul.f32 %v1749, %v1725
  %v1894 = vmul.f32 %v1750, %v1725
  %v1895 = vmul.f32 %v1751, %v1725
  %v1896 = vmul.f32 %v1752, %v1725
  %v1897 = vmul.f32 %v1753, %v1725
  %v1898 = vmul.f32 %v1754, %v1725
  %v1899 = vmul.f32 %v1755, %v1725
  %v1900 = vmul.f32 %v1756, %v1725
  %v1901 = vmul.f32 %v1757, %v1725
  %v1902 = vmul.f32 %v1758, %v1725
  %v1903 = vmul.f32 %v1759, %v1725
  %v1904 = vmul.f32 %v1760, %v1725
  %v1905 = vmul.f32 %v1761, %v1725
  %v1906 = vmul.f32 %v1762, %v1725
  %v1907 = vmul.f32 %v1763, %v1725
  %v1908 = vmul.f32 %v1764, %v1725
  %v1909 = vmul.f32 %v1765, %v1725
  %v1910 = vmul.f32 %v1766, %v1725
  %v1911 = vmul.f32 %v1767, %v1725
  %v1912 = vmul.f32 %v1768, %v1725
  %v1913 = vmul.f32 %v1769, %v1725
  %v1914 = vmul.f32 %v1770, %v1725
  %v1915 = vmul.f32 %v1771, %v1725
  %v1916 = vmul.f32 %v1772, %v1725
  %v1917 = vmul.f32 %v1773, %v1725
  %v1918 = vmul.f32 %v1774, %v1725
  %v1919 = vmul.f32 %v1775, %v1725
  %v1920 = vmul.f32 %v1776, %v1725
  %v1921 = vmul.f32 %v1777, %v1725
  %v1922 = vmul.f32 %v1778, %v1725
  %v1923 = vmul.f32 %v1779, %v1725
  %v1924 = vmul.f32 %v1780, %v1725
  %v1925 = vmul.f32 %v1781, %v1725
  %v1926 = vmul.f32 %v1782, %v1725
  %v1927 = vmul.f32 %v1783, %v1725
  %v1928 = vmul.f32 %v1784, %v1725
  %v1929 = vmul.f32 %v1785, %v1725
  %v1930 = vmul.f32 %v1786, %v1725
  %v1931 = vmul.f32 %v1787, %v1725
  %v1932 = vmul.f32 %v1788, %v1725
  %v1933 = vmul.f32 %v1789, %v1725
  %v1934 = vmul.f32 %v1790, %v1725
  %v1935 = vmul.f32 %v1791, %v1725
  %v1936 = vmul.f32 %v1792, %v1725
  %v1937 = vmul.f32 %v1793, %v1725
  %v1938 = vmul.f32 %v1794, %v1725
  %v1939 = vmul.f32 %v1795, %v1725
  %v1940 = vmul.f32 %v1796, %v1725
  %v1941 = vmul.f32 %v1797, %v1725
  %v1942 = vmul.f32 %v1798, %v1725
  %v1943 = vmul.f32 %v1799, %v1725
  %v1944 = vmul.f32 %v1800, %v1725
  %v1945 = vmul.f32 %v1801, %v1725
  %v1946 = vmul.f32 %v1802, %v1725
  %v1947 = vmul.f32 %v1803, %v1725
  %v1948 = vmul.f32 %v1804, %v1725
  %v1949 = vmul.f32 %v1805, %v1725
  %v1950 = vmul.f32 %v1806, %v1725
  %v1951 = vmul.f32 %v1807, %v1725
  %v1952 = vmul.f32 %v1808, %v1725
  %v1953 = vmul.f32 %v1809, %v1725
  %v1954 = vmul.f32 %v1810, %v1725
  %v1955 = vmul.f32 %v1811, %v1725
  %v1956 = vmul.f32 %v1812, %v1725
  %v1957 = vmul.f32 %v1813, %v1725
  %v1958 = vmul.f32 %v1814, %v1725
  %v1959 = vmul.f32 %v1815, %v1725
  %v1960 = vmul.f32 %v1816, %v1725
  %v1961 = vmul.f32 %v1817, %v1725
  %v1962 = vmul.f32 %v1818, %v1725
  %v1963 = vmul.f32 %v1819, %v1725
  %v1964 = vmul.f32 %v1820, %v1725
  %v1965 = vmul.f32 %v1821, %v1725
  %v1966 = vmul.f32 %v1822, %v1725
  %v1967 = vmul.f32 %v1823, %v1725
  %v1968 = vmul.f32 %v1824, %v1725
  %v1969 = vmul.f32 %v1825, %v1725
  %v1970 = vmul.f32 %v1826, %v1725
  %v1971 = vmul.f32 %v1827, %v1725
  %v1972 = vmul.f32 %v1828, %v1725
  %v1973 = vmul.f32 %v1829, %v1725
  %v1974 = vmul.f32 %v1830, %v1725
  %v1975 = vmul.f32 %v1831, %v1725
  %v1976 = vmul.f32 %v1832, %v1725
  %v1977 = vmul.f32 %v1833, %v1725
  %v1978 = vmul.f32 %v1834, %v1725
  %v1979 = vmul.f32 %v1835, %v1725
  %v1980 = vmul.f32 %v1836, %v1725
  %v1981 = vmul.f32 %v1837, %v1725
  %v1982 = vmul.f32 %v1838, %v1725
  %v1983 = vmul.f32 %v1839, %v1725
  %v1984 = vmul.f32 %v1840, %v1725
  %v1985 = vmul.f32 %v1841, %v1725
  %v1986 = vmul.f32 %v1842, %v1725
  %v1987 = vmul.f32 %v1843, %v1725
  %v1988 = vmul.f32 %v1844, %v1725
  %v1989 = vmul.f32 %v1845, %v1725
  %v1990 = vmul.f32 %v1846, %v1725
  %v1991 = vmul.f32 %v1847, %v1725
  %v1992 = vmul.f32 %v1848, %v1725
  %v1993 = vmul.f32 %v1849, %v1725
  %v1994 = vmul.f32 %v1850, %v1725
  %v1995 = vmul.f32 %v1851, %v1725
  %v1996 = vmul.f32 %v1852, %v1725
  %v1997 = vmul.f32 %v1853, %v1725
  %v1998 = vmul.f32 %v1854, %v1725
  %v1999 = vmul.f32 %v1855, %v1725
  %v2000 = vmul.f32 %v1856, %v1725
  %v2001 = vmul.f32 %v1857, %v1725
  %v2002 = vmul.f32 %v1858, %v1725
  %v2003 = vmul.f32 %v1859, %v1725
  %v2004 = vmul.f32 %v1860, %v1725
  %v2005 = vmul.f32 %v1861, %v1725
  %v2006 = vmul.f32 %v1862, %v1725
  %v2007 = vmul.f32 %v1863, %v1725
  %v2008 = vmul.f32 %v1864, %v1725
  %v2009 = vmul.f32 %v1865, %v1725
  %v2010 = vmul.f32 %v1866, %v1725
  %v2011 = vmul.f32 %v1867, %v1725
  %v2012 = vmul.f32 %v1868, %v1725
  %v2013 = vmul.f32 %v1869, %v1725
  %v2014 = vld [vmem:[%s3] sm:$0x1]
  %v2016 = vlaneseq
  %v2017 = vshrl.u32 %v2016, 7
  %v2018 = vsub.s32 0, %v2017
  %v2019 = vrot.slane %v2014, %v2018
  %v2021 = vmul.f32 %v1870, %v2019
  %v2022 = vmul.f32 %v1871, %v2019
  %v2023 = vmul.f32 %v1872, %v2019
  %v2024 = vmul.f32 %v1873, %v2019
  %v2025 = vmul.f32 %v1874, %v2019
  %v2026 = vmul.f32 %v1875, %v2019
  %v2027 = vmul.f32 %v1876, %v2019
  %v2028 = vmul.f32 %v1877, %v2019
  %v2029 = vmul.f32 %v1878, %v2019
  %v2030 = vmul.f32 %v1879, %v2019
  %v2031 = vmul.f32 %v1880, %v2019
  %v2032 = vmul.f32 %v1881, %v2019
  %v2033 = vmul.f32 %v1882, %v2019
  %v2034 = vmul.f32 %v1883, %v2019
  %v2035 = vmul.f32 %v1884, %v2019
  %v2036 = vmul.f32 %v1885, %v2019
  %v2037 = vmul.f32 %v1886, %v2019
  %v2038 = vmul.f32 %v1887, %v2019
  %v2039 = vmul.f32 %v1888, %v2019
  %v2040 = vmul.f32 %v1889, %v2019
  %v2041 = vmul.f32 %v1890, %v2019
  %v2042 = vmul.f32 %v1891, %v2019
  %v2043 = vmul.f32 %v1892, %v2019
  %v2044 = vmul.f32 %v1893, %v2019
  %v2045 = vmul.f32 %v1894, %v2019
  %v2046 = vmul.f32 %v1895, %v2019
  %v2047 = vmul.f32 %v1896, %v2019
  %v2048 = vmul.f32 %v1897, %v2019
  %v2049 = vmul.f32 %v1898, %v2019
  %v2050 = vmul.f32 %v1899, %v2019
  %v2051 = vmul.f32 %v1900, %v2019
  %v2052 = vmul.f32 %v1901, %v2019
  %v2053 = vmul.f32 %v1902, %v2019
  %v2054 = vmul.f32 %v1903, %v2019
  %v2055 = vmul.f32 %v1904, %v2019
  %v2056 = vmul.f32 %v1905, %v2019
  %v2057 = vmul.f32 %v1906, %v2019
  %v2058 = vmul.f32 %v1907, %v2019
  %v2059 = vmul.f32 %v1908, %v2019
  %v2060 = vmul.f32 %v1909, %v2019
  %v2061 = vmul.f32 %v1910, %v2019
  %v2062 = vmul.f32 %v1911, %v2019
  %v2063 = vmul.f32 %v1912, %v2019
  %v2064 = vmul.f32 %v1913, %v2019
  %v2065 = vmul.f32 %v1914, %v2019
  %v2066 = vmul.f32 %v1915, %v2019
  %v2067 = vmul.f32 %v1916, %v2019
  %v2068 = vmul.f32 %v1917, %v2019
  %v2069 = vmul.f32 %v1918, %v2019
  %v2070 = vmul.f32 %v1919, %v2019
  %v2071 = vmul.f32 %v1920, %v2019
  %v2072 = vmul.f32 %v1921, %v2019
  %v2073 = vmul.f32 %v1922, %v2019
  %v2074 = vmul.f32 %v1923, %v2019
  %v2075 = vmul.f32 %v1924, %v2019
  %v2076 = vmul.f32 %v1925, %v2019
  %v2077 = vmul.f32 %v1926, %v2019
  %v2078 = vmul.f32 %v1927, %v2019
  %v2079 = vmul.f32 %v1928, %v2019
  %v2080 = vmul.f32 %v1929, %v2019
  %v2081 = vmul.f32 %v1930, %v2019
  %v2082 = vmul.f32 %v1931, %v2019
  %v2083 = vmul.f32 %v1932, %v2019
  %v2084 = vmul.f32 %v1933, %v2019
  %v2085 = vmul.f32 %v1934, %v2019
  %v2086 = vmul.f32 %v1935, %v2019
  %v2087 = vmul.f32 %v1936, %v2019
  %v2088 = vmul.f32 %v1937, %v2019
  %v2089 = vmul.f32 %v1938, %v2019
  %v2090 = vmul.f32 %v1939, %v2019
  %v2091 = vmul.f32 %v1940, %v2019
  %v2092 = vmul.f32 %v1941, %v2019
  %v2093 = vmul.f32 %v1942, %v2019
  %v2094 = vmul.f32 %v1943, %v2019
  %v2095 = vmul.f32 %v1944, %v2019
  %v2096 = vmul.f32 %v1945, %v2019
  %v2097 = vmul.f32 %v1946, %v2019
  %v2098 = vmul.f32 %v1947, %v2019
  %v2099 = vmul.f32 %v1948, %v2019
  %v2100 = vmul.f32 %v1949, %v2019
  %v2101 = vmul.f32 %v1950, %v2019
  %v2102 = vmul.f32 %v1951, %v2019
  %v2103 = vmul.f32 %v1952, %v2019
  %v2104 = vmul.f32 %v1953, %v2019
  %v2105 = vmul.f32 %v1954, %v2019
  %v2106 = vmul.f32 %v1955, %v2019
  %v2107 = vmul.f32 %v1956, %v2019
  %v2108 = vmul.f32 %v1957, %v2019
  %v2109 = vmul.f32 %v1958, %v2019
  %v2110 = vmul.f32 %v1959, %v2019
  %v2111 = vmul.f32 %v1960, %v2019
  %v2112 = vmul.f32 %v1961, %v2019
  %v2113 = vmul.f32 %v1962, %v2019
  %v2114 = vmul.f32 %v1963, %v2019
  %v2115 = vmul.f32 %v1964, %v2019
  %v2116 = vmul.f32 %v1965, %v2019
  %v2117 = vmul.f32 %v1966, %v2019
  %v2118 = vmul.f32 %v1967, %v2019
  %v2119 = vmul.f32 %v1968, %v2019
  %v2120 = vmul.f32 %v1969, %v2019
  %v2121 = vmul.f32 %v1970, %v2019
  %v2122 = vmul.f32 %v1971, %v2019
  %v2123 = vmul.f32 %v1972, %v2019
  %v2124 = vmul.f32 %v1973, %v2019
  %v2125 = vmul.f32 %v1974, %v2019
  %v2126 = vmul.f32 %v1975, %v2019
  %v2127 = vmul.f32 %v1976, %v2019
  %v2128 = vmul.f32 %v1977, %v2019
  %v2129 = vmul.f32 %v1978, %v2019
  %v2130 = vmul.f32 %v1979, %v2019
  %v2131 = vmul.f32 %v1980, %v2019
  %v2132 = vmul.f32 %v1981, %v2019
  %v2133 = vmul.f32 %v1982, %v2019
  %v2134 = vmul.f32 %v1983, %v2019
  %v2135 = vmul.f32 %v1984, %v2019
  %v2136 = vmul.f32 %v1985, %v2019
  %v2137 = vmul.f32 %v1986, %v2019
  %v2138 = vmul.f32 %v1987, %v2019
  %v2139 = vmul.f32 %v1988, %v2019
  %v2140 = vmul.f32 %v1989, %v2019
  %v2141 = vmul.f32 %v1990, %v2019
  %v2142 = vmul.f32 %v1991, %v2019
  %v2143 = vmul.f32 %v1992, %v2019
  %v2144 = vmul.f32 %v1993, %v2019
  %v2145 = vmul.f32 %v1994, %v2019
  %v2146 = vmul.f32 %v1995, %v2019
  %v2147 = vmul.f32 %v1996, %v2019
  %v2148 = vmul.f32 %v1997, %v2019
  %v2149 = vmul.f32 %v1998, %v2019
  %v2150 = vmul.f32 %v1999, %v2019
  %v2151 = vmul.f32 %v2000, %v2019
  %v2152 = vmul.f32 %v2001, %v2019
  %v2153 = vmul.f32 %v2002, %v2019
  %v2154 = vmul.f32 %v2003, %v2019
  %v2155 = vmul.f32 %v2004, %v2019
  %v2156 = vmul.f32 %v2005, %v2019
  %v2157 = vmul.f32 %v2006, %v2019
  %v2158 = vmul.f32 %v2007, %v2019
  %v2159 = vmul.f32 %v2008, %v2019
  %v2160 = vmul.f32 %v2009, %v2019
  %v2161 = vmul.f32 %v2010, %v2019
  %v2162 = vmul.f32 %v2011, %v2019
  %v2163 = vmul.f32 %v2012, %v2019
  %v2164 = vmul.f32 %v2013, %v2019
  %v2165 = vld [vmem:[%s4] sm:$0x1]
  %v2167 = vlaneseq
  %v2168 = vshrl.u32 %v2167, 7
  %v2169 = vsub.s32 0, %v2168
  %v2170 = vrot.slane %v2165, %v2169
  %v2172 = vadd.f32 %v2021, %v2170
  %v2173 = vadd.f32 %v2022, %v2170
  %v2174 = vadd.f32 %v2023, %v2170
  %v2175 = vadd.f32 %v2024, %v2170
  %v2176 = vadd.f32 %v2025, %v2170
  %v2177 = vadd.f32 %v2026, %v2170
  %v2178 = vadd.f32 %v2027, %v2170
  %v2179 = vadd.f32 %v2028, %v2170
  %v2180 = vadd.f32 %v2029, %v2170
  %v2181 = vadd.f32 %v2030, %v2170
  %v2182 = vadd.f32 %v2031, %v2170
  %v2183 = vadd.f32 %v2032, %v2170
  %v2184 = vadd.f32 %v2033, %v2170
  %v2185 = vadd.f32 %v2034, %v2170
  %v2186 = vadd.f32 %v2035, %v2170
  %v2187 = vadd.f32 %v2036, %v2170
  %v2188 = vadd.f32 %v2037, %v2170
  %v2189 = vadd.f32 %v2038, %v2170
  %v2190 = vadd.f32 %v2039, %v2170
  %v2191 = vadd.f32 %v2040, %v2170
  %v2192 = vadd.f32 %v2041, %v2170
  %v2193 = vadd.f32 %v2042, %v2170
  %v2194 = vadd.f32 %v2043, %v2170
  %v2195 = vadd.f32 %v2044, %v2170
  %v2196 = vadd.f32 %v2045, %v2170
  %v2197 = vadd.f32 %v2046, %v2170
  %v2198 = vadd.f32 %v2047, %v2170
  %v2199 = vadd.f32 %v2048, %v2170
  %v2200 = vadd.f32 %v2049, %v2170
  %v2201 = vadd.f32 %v2050, %v2170
  %v2202 = vadd.f32 %v2051, %v2170
  %v2203 = vadd.f32 %v2052, %v2170
  %v2204 = vadd.f32 %v2053, %v2170
  %v2205 = vadd.f32 %v2054, %v2170
  %v2206 = vadd.f32 %v2055, %v2170
  %v2207 = vadd.f32 %v2056, %v2170
  %v2208 = vadd.f32 %v2057, %v2170
  %v2209 = vadd.f32 %v2058, %v2170
  %v2210 = vadd.f32 %v2059, %v2170
  %v2211 = vadd.f32 %v2060, %v2170
  %v2212 = vadd.f32 %v2061, %v2170
  %v2213 = vadd.f32 %v2062, %v2170
  %v2214 = vadd.f32 %v2063, %v2170
  %v2215 = vadd.f32 %v2064, %v2170
  %v2216 = vadd.f32 %v2065, %v2170
  %v2217 = vadd.f32 %v2066, %v2170
  %v2218 = vadd.f32 %v2067, %v2170
  %v2219 = vadd.f32 %v2068, %v2170
  %v2220 = vadd.f32 %v2069, %v2170
  %v2221 = vadd.f32 %v2070, %v2170
  %v2222 = vadd.f32 %v2071, %v2170
  %v2223 = vadd.f32 %v2072, %v2170
  %v2224 = vadd.f32 %v2073, %v2170
  %v2225 = vadd.f32 %v2074, %v2170
  %v2226 = vadd.f32 %v2075, %v2170
  %v2227 = vadd.f32 %v2076, %v2170
  %v2228 = vadd.f32 %v2077, %v2170
  %v2229 = vadd.f32 %v2078, %v2170
  %v2230 = vadd.f32 %v2079, %v2170
  %v2231 = vadd.f32 %v2080, %v2170
  %v2232 = vadd.f32 %v2081, %v2170
  %v2233 = vadd.f32 %v2082, %v2170
  %v2234 = vadd.f32 %v2083, %v2170
  %v2235 = vadd.f32 %v2084, %v2170
  %v2236 = vadd.f32 %v2085, %v2170
  %v2237 = vadd.f32 %v2086, %v2170
  %v2238 = vadd.f32 %v2087, %v2170
  %v2239 = vadd.f32 %v2088, %v2170
  %v2240 = vadd.f32 %v2089, %v2170
  %v2241 = vadd.f32 %v2090, %v2170
  %v2242 = vadd.f32 %v2091, %v2170
  %v2243 = vadd.f32 %v2092, %v2170
  %v2244 = vadd.f32 %v2093, %v2170
  %v2245 = vadd.f32 %v2094, %v2170
  %v2246 = vadd.f32 %v2095, %v2170
  %v2247 = vadd.f32 %v2096, %v2170
  %v2248 = vadd.f32 %v2097, %v2170
  %v2249 = vadd.f32 %v2098, %v2170
  %v2250 = vadd.f32 %v2099, %v2170
  %v2251 = vadd.f32 %v2100, %v2170
  %v2252 = vadd.f32 %v2101, %v2170
  %v2253 = vadd.f32 %v2102, %v2170
  %v2254 = vadd.f32 %v2103, %v2170
  %v2255 = vadd.f32 %v2104, %v2170
  %v2256 = vadd.f32 %v2105, %v2170
  %v2257 = vadd.f32 %v2106, %v2170
  %v2258 = vadd.f32 %v2107, %v2170
  %v2259 = vadd.f32 %v2108, %v2170
  %v2260 = vadd.f32 %v2109, %v2170
  %v2261 = vadd.f32 %v2110, %v2170
  %v2262 = vadd.f32 %v2111, %v2170
  %v2263 = vadd.f32 %v2112, %v2170
  %v2264 = vadd.f32 %v2113, %v2170
  %v2265 = vadd.f32 %v2114, %v2170
  %v2266 = vadd.f32 %v2115, %v2170
  %v2267 = vadd.f32 %v2116, %v2170
  %v2268 = vadd.f32 %v2117, %v2170
  %v2269 = vadd.f32 %v2118, %v2170
  %v2270 = vadd.f32 %v2119, %v2170
  %v2271 = vadd.f32 %v2120, %v2170
  %v2272 = vadd.f32 %v2121, %v2170
  %v2273 = vadd.f32 %v2122, %v2170
  %v2274 = vadd.f32 %v2123, %v2170
  %v2275 = vadd.f32 %v2124, %v2170
  %v2276 = vadd.f32 %v2125, %v2170
  %v2277 = vadd.f32 %v2126, %v2170
  %v2278 = vadd.f32 %v2127, %v2170
  %v2279 = vadd.f32 %v2128, %v2170
  %v2280 = vadd.f32 %v2129, %v2170
  %v2281 = vadd.f32 %v2130, %v2170
  %v2282 = vadd.f32 %v2131, %v2170
  %v2283 = vadd.f32 %v2132, %v2170
  %v2284 = vadd.f32 %v2133, %v2170
  %v2285 = vadd.f32 %v2134, %v2170
  %v2286 = vadd.f32 %v2135, %v2170
  %v2287 = vadd.f32 %v2136, %v2170
  %v2288 = vadd.f32 %v2137, %v2170
  %v2289 = vadd.f32 %v2138, %v2170
  %v2290 = vadd.f32 %v2139, %v2170
  %v2291 = vadd.f32 %v2140, %v2170
  %v2292 = vadd.f32 %v2141, %v2170
  %v2293 = vadd.f32 %v2142, %v2170
  %v2294 = vadd.f32 %v2143, %v2170
  %v2295 = vadd.f32 %v2144, %v2170
  %v2296 = vadd.f32 %v2145, %v2170
  %v2297 = vadd.f32 %v2146, %v2170
  %v2298 = vadd.f32 %v2147, %v2170
  %v2299 = vadd.f32 %v2148, %v2170
  %v2300 = vadd.f32 %v2149, %v2170
  %v2301 = vadd.f32 %v2150, %v2170
  %v2302 = vadd.f32 %v2151, %v2170
  %v2303 = vadd.f32 %v2152, %v2170
  %v2304 = vadd.f32 %v2153, %v2170
  %v2305 = vadd.f32 %v2154, %v2170
  %v2306 = vadd.f32 %v2155, %v2170
  %v2307 = vadd.f32 %v2156, %v2170
  %v2308 = vadd.f32 %v2157, %v2170
  %v2309 = vadd.f32 %v2158, %v2170
  %v2310 = vadd.f32 %v2159, %v2170
  %v2311 = vadd.f32 %v2160, %v2170
  %v2312 = vadd.f32 %v2161, %v2170
  %v2313 = vadd.f32 %v2162, %v2170
  %v2314 = vadd.f32 %v2163, %v2170
  %v2315 = vadd.f32 %v2164, %v2170
  %v2316 = vmax.f32 %v2172, 0.0
  %v2317 = vmax.f32 %v2173, 0.0
  %v2318 = vmax.f32 %v2174, 0.0
  %v2319 = vmax.f32 %v2175, 0.0
  %v2320 = vmax.f32 %v2176, 0.0
  %v2321 = vmax.f32 %v2177, 0.0
  %v2322 = vmax.f32 %v2178, 0.0
  %v2323 = vmax.f32 %v2179, 0.0
  %v2324 = vmax.f32 %v2180, 0.0
  %v2325 = vmax.f32 %v2181, 0.0
  %v2326 = vmax.f32 %v2182, 0.0
  %v2327 = vmax.f32 %v2183, 0.0
  %v2328 = vmax.f32 %v2184, 0.0
  %v2329 = vmax.f32 %v2185, 0.0
  %v2330 = vmax.f32 %v2186, 0.0
  %v2331 = vmax.f32 %v2187, 0.0
  %v2332 = vmax.f32 %v2188, 0.0
  %v2333 = vmax.f32 %v2189, 0.0
  %v2334 = vmax.f32 %v2190, 0.0
  %v2335 = vmax.f32 %v2191, 0.0
  %v2336 = vmax.f32 %v2192, 0.0
  %v2337 = vmax.f32 %v2193, 0.0
  %v2338 = vmax.f32 %v2194, 0.0
  %v2339 = vmax.f32 %v2195, 0.0
  %v2340 = vmax.f32 %v2196, 0.0
  %v2341 = vmax.f32 %v2197, 0.0
  %v2342 = vmax.f32 %v2198, 0.0
  %v2343 = vmax.f32 %v2199, 0.0
  %v2344 = vmax.f32 %v2200, 0.0
  %v2345 = vmax.f32 %v2201, 0.0
  %v2346 = vmax.f32 %v2202, 0.0
  %v2347 = vmax.f32 %v2203, 0.0
  %v2348 = vmax.f32 %v2204, 0.0
  %v2349 = vmax.f32 %v2205, 0.0
  %v2350 = vmax.f32 %v2206, 0.0
  %v2351 = vmax.f32 %v2207, 0.0
  %v2352 = vmax.f32 %v2208, 0.0
  %v2353 = vmax.f32 %v2209, 0.0
  %v2354 = vmax.f32 %v2210, 0.0
  %v2355 = vmax.f32 %v2211, 0.0
  %v2356 = vmax.f32 %v2212, 0.0
  %v2357 = vmax.f32 %v2213, 0.0
  %v2358 = vmax.f32 %v2214, 0.0
  %v2359 = vmax.f32 %v2215, 0.0
  %v2360 = vmax.f32 %v2216, 0.0
  %v2361 = vmax.f32 %v2217, 0.0
  %v2362 = vmax.f32 %v2218, 0.0
  %v2363 = vmax.f32 %v2219, 0.0
  %v2364 = vmax.f32 %v2220, 0.0
  %v2365 = vmax.f32 %v2221, 0.0
  %v2366 = vmax.f32 %v2222, 0.0
  %v2367 = vmax.f32 %v2223, 0.0
  %v2368 = vmax.f32 %v2224, 0.0
  %v2369 = vmax.f32 %v2225, 0.0
  %v2370 = vmax.f32 %v2226, 0.0
  %v2371 = vmax.f32 %v2227, 0.0
  %v2372 = vmax.f32 %v2228, 0.0
  %v2373 = vmax.f32 %v2229, 0.0
  %v2374 = vmax.f32 %v2230, 0.0
  %v2375 = vmax.f32 %v2231, 0.0
  %v2376 = vmax.f32 %v2232, 0.0
  %v2377 = vmax.f32 %v2233, 0.0
  %v2378 = vmax.f32 %v2234, 0.0
  %v2379 = vmax.f32 %v2235, 0.0
  %v2380 = vmax.f32 %v2236, 0.0
  %v2381 = vmax.f32 %v2237, 0.0
  %v2382 = vmax.f32 %v2238, 0.0
  %v2383 = vmax.f32 %v2239, 0.0
  %v2384 = vmax.f32 %v2240, 0.0
  %v2385 = vmax.f32 %v2241, 0.0
  %v2386 = vmax.f32 %v2242, 0.0
  %v2387 = vmax.f32 %v2243, 0.0
  %v2388 = vmax.f32 %v2244, 0.0
  %v2389 = vmax.f32 %v2245, 0.0
  %v2390 = vmax.f32 %v2246, 0.0
  %v2391 = vmax.f32 %v2247, 0.0
  %v2392 = vmax.f32 %v2248, 0.0
  %v2393 = vmax.f32 %v2249, 0.0
  %v2394 = vmax.f32 %v2250, 0.0
  %v2395 = vmax.f32 %v2251, 0.0
  %v2396 = vmax.f32 %v2252, 0.0
  %v2397 = vmax.f32 %v2253, 0.0
  %v2398 = vmax.f32 %v2254, 0.0
  %v2399 = vmax.f32 %v2255, 0.0
  %v2400 = vmax.f32 %v2256, 0.0
  %v2401 = vmax.f32 %v2257, 0.0
  %v2402 = vmax.f32 %v2258, 0.0
  %v2403 = vmax.f32 %v2259, 0.0
  %v2404 = vmax.f32 %v2260, 0.0
  %v2405 = vmax.f32 %v2261, 0.0
  %v2406 = vmax.f32 %v2262, 0.0
  %v2407 = vmax.f32 %v2263, 0.0
  %v2408 = vmax.f32 %v2264, 0.0
  %v2409 = vmax.f32 %v2265, 0.0
  %v2410 = vmax.f32 %v2266, 0.0
  %v2411 = vmax.f32 %v2267, 0.0
  %v2412 = vmax.f32 %v2268, 0.0
  %v2413 = vmax.f32 %v2269, 0.0
  %v2414 = vmax.f32 %v2270, 0.0
  %v2415 = vmax.f32 %v2271, 0.0
  %v2416 = vmax.f32 %v2272, 0.0
  %v2417 = vmax.f32 %v2273, 0.0
  %v2418 = vmax.f32 %v2274, 0.0
  %v2419 = vmax.f32 %v2275, 0.0
  %v2420 = vmax.f32 %v2276, 0.0
  %v2421 = vmax.f32 %v2277, 0.0
  %v2422 = vmax.f32 %v2278, 0.0
  %v2423 = vmax.f32 %v2279, 0.0
  %v2424 = vmax.f32 %v2280, 0.0
  %v2425 = vmax.f32 %v2281, 0.0
  %v2426 = vmax.f32 %v2282, 0.0
  %v2427 = vmax.f32 %v2283, 0.0
  %v2428 = vmax.f32 %v2284, 0.0
  %v2429 = vmax.f32 %v2285, 0.0
  %v2430 = vmax.f32 %v2286, 0.0
  %v2431 = vmax.f32 %v2287, 0.0
  %v2432 = vmax.f32 %v2288, 0.0
  %v2433 = vmax.f32 %v2289, 0.0
  %v2434 = vmax.f32 %v2290, 0.0
  %v2435 = vmax.f32 %v2291, 0.0
  %v2436 = vmax.f32 %v2292, 0.0
  %v2437 = vmax.f32 %v2293, 0.0
  %v2438 = vmax.f32 %v2294, 0.0
  %v2439 = vmax.f32 %v2295, 0.0
  %v2440 = vmax.f32 %v2296, 0.0
  %v2441 = vmax.f32 %v2297, 0.0
  %v2442 = vmax.f32 %v2298, 0.0
  %v2443 = vmax.f32 %v2299, 0.0
  %v2444 = vmax.f32 %v2300, 0.0
  %v2445 = vmax.f32 %v2301, 0.0
  %v2446 = vmax.f32 %v2302, 0.0
  %v2447 = vmax.f32 %v2303, 0.0
  %v2448 = vmax.f32 %v2304, 0.0
  %v2449 = vmax.f32 %v2305, 0.0
  %v2450 = vmax.f32 %v2306, 0.0
  %v2451 = vmax.f32 %v2307, 0.0
  %v2452 = vmax.f32 %v2308, 0.0
  %v2453 = vmax.f32 %v2309, 0.0
  %v2454 = vmax.f32 %v2310, 0.0
  %v2455 = vmax.f32 %v2311, 0.0
  %v2456 = vmax.f32 %v2312, 0.0
  %v2457 = vmax.f32 %v2313, 0.0
  %v2458 = vmax.f32 %v2314, 0.0
  %v2459 = vmax.f32 %v2315, 0.0
  %2460 = vst [vmem:[%s5] sm:$0xff] %v2316
  %2461 = vst [vmem:[%s5 + $0x8] sm:$0xff] %v2317
  %2462 = vst [vmem:[%s5 + $0x10] sm:$0xff] %v2318
  %2463 = vst [vmem:[%s5 + $0x18] sm:$0xff] %v2319
  %2464 = vst [vmem:[%s5 + $0x20] sm:$0xff] %v2320
  %2465 = vst [vmem:[%s5 + $0x28] sm:$0xff] %v2321
  %2466 = vst [vmem:[%s5 + $0x30] sm:$0xff] %v2322
  %2467 = vst [vmem:[%s5 + $0x38] sm:$0xff] %v2323
  %2468 = vst [vmem:[%s5 + $0x40] sm:$0xff] %v2324
  %2469 = vst [vmem:[%s5 + $0x48] sm:$0xff] %v2325
  %2470 = vst [vmem:[%s5 + $0x50] sm:$0xff] %v2326
  %2471 = vst [vmem:[%s5 + $0x58] sm:$0xff] %v2327
  %2472 = vst [vmem:[%s5 + $0x60] sm:$0xff] %v2328
  %2473 = vst [vmem:[%s5 + $0x68] sm:$0xff] %v2329
  %2474 = vst [vmem:[%s5 + $0x70] sm:$0xff] %v2330
  %2475 = vst [vmem:[%s5 + $0x78] sm:$0xff] %v2331
  %2476 = vst [vmem:[%s5 + $0x80] sm:$0xff] %v2332
  %2477 = vst [vmem:[%s5 + $0x88] sm:$0xff] %v2333
  %2478 = vst [vmem:[%s5 + $0x90] sm:$0xff] %v2334
  %2479 = vst [vmem:[%s5 + $0x98] sm:$0xff] %v2335
  %2480 = vst [vmem:[%s5 + $0xa0] sm:$0xff] %v2336
  %2481 = vst [vmem:[%s5 + $0xa8] sm:$0xff] %v2337
  %2482 = vst [vmem:[%s5 + $0xb0] sm:$0xff] %v2338
  %2483 = vst [vmem:[%s5 + $0xb8] sm:$0xff] %v2339
  %2484 = vst [vmem:[%s5 + $0xc0] sm:$0xff] %v2340
  %2485 = vst [vmem:[%s5 + $0xc8] sm:$0xff] %v2341
  %2486 = vst [vmem:[%s5 + $0xd0] sm:$0xff] %v2342
  %2487 = vst [vmem:[%s5 + $0xd8] sm:$0xff] %v2343
  %2488 = vst [vmem:[%s5 + $0xe0] sm:$0xff] %v2344
  %2489 = vst [vmem:[%s5 + $0xe8] sm:$0xff] %v2345
  %2490 = vst [vmem:[%s5 + $0xf0] sm:$0xff] %v2346
  %2491 = vst [vmem:[%s5 + $0xf8] sm:$0xff] %v2347
  %2492 = vst [vmem:[%s5 + $0x100] sm:$0xff] %v2348
  %2493 = vst [vmem:[%s5 + $0x108] sm:$0xff] %v2349
  %2494 = vst [vmem:[%s5 + $0x110] sm:$0xff] %v2350
  %2495 = vst [vmem:[%s5 + $0x118] sm:$0xff] %v2351
  %2496 = vst [vmem:[%s5 + $0x120] sm:$0xff] %v2352
  %2497 = vst [vmem:[%s5 + $0x128] sm:$0xff] %v2353
  %2498 = vst [vmem:[%s5 + $0x130] sm:$0xff] %v2354
  %2499 = vst [vmem:[%s5 + $0x138] sm:$0xff] %v2355
  %2500 = vst [vmem:[%s5 + $0x140] sm:$0xff] %v2356
  %2501 = vst [vmem:[%s5 + $0x148] sm:$0xff] %v2357
  %2502 = vst [vmem:[%s5 + $0x150] sm:$0xff] %v2358
  %2503 = vst [vmem:[%s5 + $0x158] sm:$0xff] %v2359
  %2504 = vst [vmem:[%s5 + $0x160] sm:$0xff] %v2360
  %2505 = vst [vmem:[%s5 + $0x168] sm:$0xff] %v2361
  %2506 = vst [vmem:[%s5 + $0x170] sm:$0xff] %v2362
  %2507 = vst [vmem:[%s5 + $0x178] sm:$0xff] %v2363
  %2508 = vst [vmem:[%s5 + $0x180] sm:$0xff] %v2364
  %2509 = vst [vmem:[%s5 + $0x188] sm:$0xff] %v2365
  %2510 = vst [vmem:[%s5 + $0x190] sm:$0xff] %v2366
  %2511 = vst [vmem:[%s5 + $0x198] sm:$0xff] %v2367
  %2512 = vst [vmem:[%s5 + $0x1a0] sm:$0xff] %v2368
  %2513 = vst [vmem:[%s5 + $0x1a8] sm:$0xff] %v2369
  %2514 = vst [vmem:[%s5 + $0x1b0] sm:$0xff] %v2370
  %2515 = vst [vmem:[%s5 + $0x1b8] sm:$0xff] %v2371
  %2516 = vst [vmem:[%s5 + $0x1c0] sm:$0xff] %v2372
  %2517 = vst [vmem:[%s5 + $0x1c8] sm:$0xff] %v2373
  %2518 = vst [vmem:[%s5 + $0x1d0] sm:$0xff] %v2374
  %2519 = vst [vmem:[%s5 + $0x1d8] sm:$0xff] %v2375
  %2520 = vst [vmem:[%s5 + $0x1e0] sm:$0xff] %v2376
  %2521 = vst [vmem:[%s5 + $0x1e8] sm:$0xff] %v2377
  %2522 = vst [vmem:[%s5 + $0x1f0] sm:$0xff] %v2378
  %2523 = vst [vmem:[%s5 + $0x1f8] sm:$0xff] %v2379
  %2524 = vst [vmem:[%s5 + $0x200] sm:$0xff] %v2380
  %2525 = vst [vmem:[%s5 + $0x208] sm:$0xff] %v2381
  %2526 = vst [vmem:[%s5 + $0x210] sm:$0xff] %v2382
  %2527 = vst [vmem:[%s5 + $0x218] sm:$0xff] %v2383
  %2528 = vst [vmem:[%s5 + $0x220] sm:$0xff] %v2384
  %2529 = vst [vmem:[%s5 + $0x228] sm:$0xff] %v2385
  %2530 = vst [vmem:[%s5 + $0x230] sm:$0xff] %v2386
  %2531 = vst [vmem:[%s5 + $0x238] sm:$0xff] %v2387
  %2532 = vst [vmem:[%s5 + $0x240] sm:$0xff] %v2388
  %2533 = vst [vmem:[%s5 + $0x248] sm:$0xff] %v2389
  %2534 = vst [vmem:[%s5 + $0x250] sm:$0xff] %v2390
  %2535 = vst [vmem:[%s5 + $0x258] sm:$0xff] %v2391
  %2536 = vst [vmem:[%s5 + $0x260] sm:$0xff] %v2392
  %2537 = vst [vmem:[%s5 + $0x268] sm:$0xff] %v2393
  %2538 = vst [vmem:[%s5 + $0x270] sm:$0xff] %v2394
  %2539 = vst [vmem:[%s5 + $0x278] sm:$0xff] %v2395
  %2540 = vst [vmem:[%s5 + $0x280] sm:$0xff] %v2396
  %2541 = vst [vmem:[%s5 + $0x288] sm:$0xff] %v2397
  %2542 = vst [vmem:[%s5 + $0x290] sm:$0xff] %v2398
  %2543 = vst [vmem:[%s5 + $0x298] sm:$0xff] %v2399
  %2544 = vst [vmem:[%s5 + $0x2a0] sm:$0xff] %v2400
  %2545 = vst [vmem:[%s5 + $0x2a8] sm:$0xff] %v2401
  %2546 = vst [vmem:[%s5 + $0x2b0] sm:$0xff] %v2402
  %2547 = vst [vmem:[%s5 + $0x2b8] sm:$0xff] %v2403
  %2548 = vst [vmem:[%s5 + $0x2c0] sm:$0xff] %v2404
  %2549 = vst [vmem:[%s5 + $0x2c8] sm:$0xff] %v2405
  %2550 = vst [vmem:[%s5 + $0x2d0] sm:$0xff] %v2406
  %2551 = vst [vmem:[%s5 + $0x2d8] sm:$0xff] %v2407
  %2552 = vst [vmem:[%s5 + $0x2e0] sm:$0xff] %v2408
  %2553 = vst [vmem:[%s5 + $0x2e8] sm:$0xff] %v2409
  %2554 = vst [vmem:[%s5 + $0x2f0] sm:$0xff] %v2410
  %2555 = vst [vmem:[%s5 + $0x2f8] sm:$0xff] %v2411
  %2556 = vst [vmem:[%s5 + $0x300] sm:$0xff] %v2412
  %2557 = vst [vmem:[%s5 + $0x308] sm:$0xff] %v2413
  %2558 = vst [vmem:[%s5 + $0x310] sm:$0xff] %v2414
  %2559 = vst [vmem:[%s5 + $0x318] sm:$0xff] %v2415
  %2560 = vst [vmem:[%s5 + $0x320] sm:$0xff] %v2416
  %2561 = vst [vmem:[%s5 + $0x328] sm:$0xff] %v2417
  %2562 = vst [vmem:[%s5 + $0x330] sm:$0xff] %v2418
  %2563 = vst [vmem:[%s5 + $0x338] sm:$0xff] %v2419
  %2564 = vst [vmem:[%s5 + $0x340] sm:$0xff] %v2420
  %2565 = vst [vmem:[%s5 + $0x348] sm:$0xff] %v2421
  %2566 = vst [vmem:[%s5 + $0x350] sm:$0xff] %v2422
  %2567 = vst [vmem:[%s5 + $0x358] sm:$0xff] %v2423
  %2568 = vst [vmem:[%s5 + $0x360] sm:$0xff] %v2424
  %2569 = vst [vmem:[%s5 + $0x368] sm:$0xff] %v2425
  %2570 = vst [vmem:[%s5 + $0x370] sm:$0xff] %v2426
  %2571 = vst [vmem:[%s5 + $0x378] sm:$0xff] %v2427
  %2572 = vst [vmem:[%s5 + $0x380] sm:$0xff] %v2428
  %2573 = vst [vmem:[%s5 + $0x388] sm:$0xff] %v2429
  %2574 = vst [vmem:[%s5 + $0x390] sm:$0xff] %v2430
  %2575 = vst [vmem:[%s5 + $0x398] sm:$0xff] %v2431
  %2576 = vst [vmem:[%s5 + $0x3a0] sm:$0xff] %v2432
  %2577 = vst [vmem:[%s5 + $0x3a8] sm:$0xff] %v2433
  %2578 = vst [vmem:[%s5 + $0x3b0] sm:$0xff] %v2434
  %2579 = vst [vmem:[%s5 + $0x3b8] sm:$0xff] %v2435
  %2580 = vst [vmem:[%s5 + $0x3c0] sm:$0xff] %v2436
  %2581 = vst [vmem:[%s5 + $0x3c8] sm:$0xff] %v2437
  %2582 = vst [vmem:[%s5 + $0x3d0] sm:$0xff] %v2438
  %2583 = vst [vmem:[%s5 + $0x3d8] sm:$0xff] %v2439
  %2584 = vst [vmem:[%s5 + $0x3e0] sm:$0xff] %v2440
  %2585 = vst [vmem:[%s5 + $0x3e8] sm:$0xff] %v2441
  %2586 = vst [vmem:[%s5 + $0x3f0] sm:$0xff] %v2442
  %2587 = vst [vmem:[%s5 + $0x3f8] sm:$0xff] %v2443
  %2588 = vst [vmem:[%s5 + $0x400] sm:$0xff] %v2444
  %2589 = vst [vmem:[%s5 + $0x408] sm:$0xff] %v2445
  %2590 = vst [vmem:[%s5 + $0x410] sm:$0xff] %v2446
  %2591 = vst [vmem:[%s5 + $0x418] sm:$0xff] %v2447
  %2592 = vst [vmem:[%s5 + $0x420] sm:$0xff] %v2448
  %2593 = vst [vmem:[%s5 + $0x428] sm:$0xff] %v2449
  %2594 = vst [vmem:[%s5 + $0x430] sm:$0xff] %v2450
  %2595 = vst [vmem:[%s5 + $0x438] sm:$0xff] %v2451
  %2596 = vst [vmem:[%s5 + $0x440] sm:$0xff] %v2452
  %2597 = vst [vmem:[%s5 + $0x448] sm:$0xff] %v2453
  %2598 = vst [vmem:[%s5 + $0x450] sm:$0xff] %v2454
  %2599 = vst [vmem:[%s5 + $0x458] sm:$0xff] %v2455
  %2600 = vst [vmem:[%s5 + $0x460] sm:$0xff] %v2456
  %2601 = vst [vmem:[%s5 + $0x468] sm:$0xff] %v2457
  %2602 = vst [vmem:[%s5 + $0x470] sm:$0xff] %v2458
  %2603 = vst [vmem:[%s5 + $0x478] sm:$0xff] %v2459
  // Predicated region
  $region22: #{lenett_forward.3} parent=0 // pred_check
    _
  $region23: #{lenett_forward.3} parent=0 // pred_check_branch
    %2605 = sbr.rel (0) target = $region25
  $region24: #{lenett_forward.3} parent=0 // pred_region
    _
  $region25: #{lenett_forward.3} parent=0 // pred_fallthru
    _
  // Predicated region
  $region26: #{lenett_forward.3} parent=0 // pred_check
    _
  $region27: #{lenett_forward.3} parent=0 // pred_check_branch
    %2607 = sbr.rel (0) target = $region29
  $region28: #{lenett_forward.3} parent=0 // pred_region
    _
  $region29: #{lenett_forward.3} parent=0 // pred_fallthru
    _

// kernel: lenett_forward.4
$region0: #{lenett_forward.4}
  #allocation0 [shape = 'u32[]', space=smem, size = 0x4, offset = 0x4, fixed_abs, tag = 'smem constant byte address 0x4 - core index']
  #allocation1 [shape = 'u32[144,128]{1,0:T(1,128)}', space=vmem, size = 0x12000, scoped, tag = 'internal scratch']
  %s0 = inlined_call_operand.vmem [shape: bf16[32,128], index: 0, kind: input, shape index: {}]
  %s1 = inlined_call_operand.vmem [shape: bf16[128,128], index: 1, kind: input, shape index: {}]
  %s2 = inlined_call_operand.vmem [shape: f32[1,128], index: 2, kind: input, shape index: {}]
  %s3 = inlined_call_operand.vmem [shape: f32[1,128], index: 3, kind: input, shape index: {}]
  %s4 = inlined_call_operand.vmem [shape: f32[1,128], index: 4, kind: input, shape index: {}]
  %s5 = inlined_call_operand.vmem [shape: f32[32,128], index: 5, kind: output, shape index: {}]
  %s6 = sld [smem:[#allocation0]]
  $region30: #{lenett_forward.4} parent=0
    _
  %s8 = ssub.s32 1, %s6
  %s9 = scalar_select 0, %s8, %s6
  // Predicated region
  $region2: #{lenett_forward.4} parent=0 // pred_check
    _
  $region3: #{lenett_forward.4} parent=0 // pred_check_branch
    %11 = sbr.rel (0) target = $region5
  $region4: #{lenett_forward.4} parent=0 // pred_region
    _
  $region5: #{lenett_forward.4} parent=0 // pred_fallthru
    _
  // Predicated region
  $region6: #{lenett_forward.4} parent=0 // pred_check
    _
  $region7: #{lenett_forward.4} parent=0 // pred_check_branch
    %13 = sbr.rel (0) target = $region9
  $region8: #{lenett_forward.4} parent=0 // pred_region
    _
  $region9: #{lenett_forward.4} parent=0 // pred_fallthru
    _
  // Predicated region
  $region10: #{lenett_forward.4} parent=0 // pred_check
    _
  $region11: #{lenett_forward.4} parent=0 // pred_check_branch
    %15 = sbr.rel (0) target = $region13
  $region12: #{lenett_forward.4} parent=0 // pred_region
    _
  $region13: #{lenett_forward.4} parent=0 // pred_fallthru
    _
  // Predicated region
  $region14: #{lenett_forward.4} parent=0 // pred_check
    _
  $region15: #{lenett_forward.4} parent=0 // pred_check_branch
    %17 = sbr.rel (0) target = $region17
  $region16: #{lenett_forward.4} parent=0 // pred_region
    _
  $region17: #{lenett_forward.4} parent=0 // pred_fallthru
    _
  // Predicated region
  $region18: #{lenett_forward.4} parent=0 // pred_check
    _
  $region19: #{lenett_forward.4} parent=0 // pred_check_branch
    %19 = sbr.rel (0) target = $region21
  $region20: #{lenett_forward.4} parent=0 // pred_region
    _
  $region21: #{lenett_forward.4} parent=0 // pred_fallthru
    _
  %v21 = vld [vmem:[%s0] sm:$0xf]
  %v22 = vld [vmem:[%s0 + $0x4] sm:$0xf]
  %v23 = vld [vmem:[%s0 + $0x8] sm:$0xf]
  %v24 = vld [vmem:[%s0 + $0xc] sm:$0xf]
  %v25 = vld [vmem:[%s1] sm:$0xf]
  %v26 = vld [vmem:[%s1 + $0x4] sm:$0xf]
  %v27 = vld [vmem:[%s1 + $0x8] sm:$0xf]
  %v28 = vld [vmem:[%s1 + $0xc] sm:$0xf]
  %v29 = vld [vmem:[%s1 + $0x10] sm:$0xf]
  %v30 = vld [vmem:[%s1 + $0x14] sm:$0xf]
  %v31 = vld [vmem:[%s1 + $0x18] sm:$0xf]
  %v32 = vld [vmem:[%s1 + $0x1c] sm:$0xf]
  %v33 = vld [vmem:[%s1 + $0x20] sm:$0xf]
  %v34 = vld [vmem:[%s1 + $0x24] sm:$0xf]
  %v35 = vld [vmem:[%s1 + $0x28] sm:$0xf]
  %v36 = vld [vmem:[%s1 + $0x2c] sm:$0xf]
  %v37 = vld [vmem:[%s1 + $0x30] sm:$0xf]
  %v38 = vld [vmem:[%s1 + $0x34] sm:$0xf]
  %v39 = vld [vmem:[%s1 + $0x38] sm:$0xf]
  %v40 = vld [vmem:[%s1 + $0x3c] sm:$0xf]
  %v41 = vld [vmem:[%s2] sm:$0x1]
  %v43 = vlaneseq
  %v44 = vshrl.u32 %v43, 7
  %v45 = vsub.s32 0, %v44
  %v46 = vrot.slane %v41, %v45
  %v52 = vunpack.c.l.b16 %v21
  %v53 = vunpack.c.l.b16 %v22
  %v54 = vunpack.c.l.b16 %v23
  %v55 = vunpack.c.l.b16 %v24
  %v56 = vpack.c.b16 %v53, %v52
  %v57 = vpack.c.b16 %v55, %v54
  %v76 = vunpack.c.l.b16 %v25
  %v77 = vunpack.c.l.b16 %v26
  %v78 = vunpack.c.l.b16 %v27
  %v79 = vunpack.c.l.b16 %v28
  %v80 = vunpack.c.l.b16 %v29
  %v81 = vunpack.c.l.b16 %v30
  %v82 = vunpack.c.l.b16 %v31
  %v83 = vunpack.c.l.b16 %v32
  %v84 = vunpack.c.l.b16 %v33
  %v85 = vunpack.c.l.b16 %v34
  %v86 = vunpack.c.l.b16 %v35
  %v87 = vunpack.c.l.b16 %v36
  %v88 = vunpack.c.l.b16 %v37
  %v89 = vunpack.c.l.b16 %v38
  %v90 = vunpack.c.l.b16 %v39
  %v91 = vunpack.c.l.b16 %v40
  %v92 = vpack.c.b16 %v77, %v76
  %v93 = vpack.c.b16 %v79, %v78
  %v94 = vpack.c.b16 %v81, %v80
  %v95 = vpack.c.b16 %v83, %v82
  %v96 = vpack.c.b16 %v85, %v84
  %v97 = vpack.c.b16 %v87, %v86
  %v98 = vpack.c.b16 %v89, %v88
  %v99 = vpack.c.b16 %v91, %v90
  %108 = vmatprep.subr.bf16.mxu0 0
  %109 = vmatpush1.bf16.msra.mxu0 %v92
  %110 = vmatprep.subr.bf16.mxu0 0
  %111 = vmatpush1.bf16.msra.mxu0 %v93
  %112 = vmatprep.subr.bf16.mxu0 0
  %113 = vmatpush1.bf16.msra.mxu0 %v94
  %114 = vmatprep.subr.bf16.mxu0 0
  %115 = vmatpush1.bf16.msra.mxu0 %v95
  %116 = vmatprep.subr.bf16.mxu0 0
  %117 = vmatpush1.bf16.msra.mxu0 %v96
  %118 = vmatprep.subr.bf16.mxu0 0
  %119 = vmatpush1.bf16.msra.mxu0 %v97
  %120 = vmatprep.subr.bf16.mxu0 0
  %121 = vmatpush1.bf16.msra.mxu0 %v98
  %122 = vmatprep.subr.bf16.mxu0 0
  %123 = vmatpush1.bf16.msra.mxu0 %v99
  %124 = vmatprep.subr.bf16.mxu0 0
  %125 = vmatpush1.bf16.msra.mxu0 0
  %126 = vmatprep.subr.bf16.mxu0 0
  %127 = vmatpush1.bf16.msra.mxu0 0
  %128 = vmatprep.subr.bf16.mxu0 0
  %129 = vmatpush1.bf16.msra.mxu0 0
  %130 = vmatprep.subr.bf16.mxu0 0
  %131 = vmatpush1.bf16.msra.mxu0 0
  %132 = vmatprep.subr.bf16.mxu0 0
  %133 = vmatpush1.bf16.msra.mxu0 0
  %134 = vmatprep.subr.bf16.mxu0 0
  %135 = vmatpush1.bf16.msra.mxu0 0
  %136 = vmatprep.subr.bf16.mxu0 0
  %137 = vmatpush1.bf16.msra.mxu0 0
  %138 = vmatprep.subr.bf16.mxu0 0
  %139 = vmatpush1.bf16.msra.mxu0 0
  %140 = vmatprep.mubr.bf16.mxu0 0
  %141 = vmatmul.mubr.bf16.gmra.mrb[0].mxu0 %v56
  %v142 = vpop.f32.mrb[0].mxu0
  %v143 = vadd.f32 %v46, %v142
  %v144 = vpop.f32.mrb[0].mxu0
  %v145 = vpop.f32.mrb[0].mxu0
  %v146 = vadd.f32 %v46, %v145
  %v147 = vpop.f32.mrb[0].mxu0
  %148 = vmatprep.mubr.bf16.mxu0 0
  %149 = vmatmul.mubr.bf16.gmra.mrb[0].mxu0 %v57
  %v150 = vpop.f32.mrb[0].mxu0
  %v151 = vadd.f32 %v46, %v150
  %v152 = vpop.f32.mrb[0].mxu0
  %v153 = vpop.f32.mrb[0].mxu0
  %v154 = vadd.f32 %v46, %v153
  %v155 = vpop.f32.mrb[0].mxu0
  %156 = vdwg.mxu0
  %v157 = vadd.f32 %v143, %v146
  %v158 = vadd.f32 %v157, %v151
  %v159 = vadd.f32 %v158, %v154
  %v160 = vrot.slane %v159, 4
  %v161 = vadd.f32 %v159, %v160
  %v162 = vrot.slane %v161, 2
  %v163 = vadd.f32 %v161, %v162
  %v164 = vrot.slane %v163, 1
  %v165 = vadd.f32 %v163, %v164
  %v166 = vmul.f32 %v165, 0.03125
  %v167 = vmul.f32 %v143, %v143
  %v168 = vmul.f32 %v146, %v146
  %v169 = vmul.f32 %v151, %v151
  %v170 = vmul.f32 %v154, %v154
  %v171 = vadd.f32 %v167, %v168
  %v172 = vadd.f32 %v171, %v169
  %v173 = vadd.f32 %v172, %v170
  %v174 = vrot.slane %v173, 4
  %v175 = vadd.f32 %v173, %v174
  %v176 = vrot.slane %v175, 2
  %v177 = vadd.f32 %v175, %v176
  %v178 = vrot.slane %v177, 1
  %v179 = vadd.f32 %v177, %v178
  %v180 = vmul.f32 %v179, 0.03125
  %v181 = vmul.f32 %v166, %v166
  %v182 = vsub.f32 %v180, %v181
  %v183 = vmax.f32 %v182, 0.0
  %v184 = vadd.f32 %v183, 1e-05
  %v185 = vrsqrt.pop %v184
  %v186 = vsub.f32 %v143, %v166
  %v187 = vsub.f32 %v146, %v166
  %v188 = vsub.f32 %v151, %v166
  %v189 = vsub.f32 %v154, %v166
  %v190 = vmul.f32 %v186, %v185
  %v191 = vmul.f32 %v187, %v185
  %v192 = vmul.f32 %v188, %v185
  %v193 = vmul.f32 %v189, %v185
  %v194 = vld [vmem:[%s3] sm:$0x1]
  %v196 = vlaneseq
  %v197 = vshrl.u32 %v196, 7
  %v198 = vsub.s32 0, %v197
  %v199 = vrot.slane %v194, %v198
  %v201 = vmul.f32 %v190, %v199
  %v202 = vmul.f32 %v191, %v199
  %v203 = vmul.f32 %v192, %v199
  %v204 = vmul.f32 %v193, %v199
  %v205 = vld [vmem:[%s4] sm:$0x1]
  %v207 = vlaneseq
  %v208 = vshrl.u32 %v207, 7
  %v209 = vsub.s32 0, %v208
  %v210 = vrot.slane %v205, %v209
  %v212 = vadd.f32 %v201, %v210
  %v213 = vadd.f32 %v202, %v210
  %v214 = vadd.f32 %v203, %v210
  %v215 = vadd.f32 %v204, %v210
  %v216 = vmax.f32 %v212, 0.0
  %v217 = vmax.f32 %v213, 0.0
  %v218 = vmax.f32 %v214, 0.0
  %v219 = vmax.f32 %v215, 0.0
  %220 = vst [vmem:[%s5] sm:$0xff] %v216
  %221 = vst [vmem:[%s5 + $0x8] sm:$0xff] %v217
  %222 = vst [vmem:[%s5 + $0x10] sm:$0xff] %v218
  %223 = vst [vmem:[%s5 + $0x18] sm:$0xff] %v219
  // Predicated region
  $region22: #{lenett_forward.4} parent=0 // pred_check
    _
  $region23: #{lenett_forward.4} parent=0 // pred_check_branch
    %225 = sbr.rel (0) target = $region25
  $region24: #{lenett_forward.4} parent=0 // pred_region
    _
  $region25: #{lenett_forward.4} parent=0 // pred_fallthru
    _
  // Predicated region
  $region26: #{lenett_forward.4} parent=0 // pred_check
    _
  $region27: #{lenett_forward.4} parent=0 // pred_check_branch
    %227 = sbr.rel (0) target = $region29
  $region28: #{lenett_forward.4} parent=0 // pred_region
    _
  $region29: #{lenett_forward.4} parent=0 // pred_fallthru
    _

// kernel: lenett_forward.5
$region0: #{lenett_forward.5}
  #allocation0 [shape = 'u32[]', space=smem, size = 0x4, offset = 0x4, fixed_abs, tag = 'smem constant byte address 0x4 - core index']
  #allocation1 [shape = 'u32[144,128]{1,0:T(1,128)}', space=vmem, size = 0x12000, scoped, tag = 'internal scratch']
  %s0 = inlined_call_operand.vmem [shape: f32[8,128], index: 0, kind: input, shape index: {}]
  %s1 = inlined_call_operand.vmem [shape: f32[128,128], index: 1, kind: input, shape index: {}]
  %s2 = inlined_call_operand.vmem [shape: f32[1,128], index: 2, kind: input, shape index: {}]
  %s3 = inlined_call_operand.vmem [shape: f32[8,128], index: 3, kind: output, shape index: {}]
  %s4 = sld [smem:[#allocation0]]
  $region22: #{lenett_forward.5} parent=0
    _
  %s6 = ssub.s32 1, %s4
  %s7 = scalar_select 0, %s6, %s4
  // Predicated region
  $region2: #{lenett_forward.5} parent=0 // pred_check
    _
  $region3: #{lenett_forward.5} parent=0 // pred_check_branch
    %9 = sbr.rel (0) target = $region5
  $region4: #{lenett_forward.5} parent=0 // pred_region
    _
  $region5: #{lenett_forward.5} parent=0 // pred_fallthru
    _
  // Predicated region
  $region6: #{lenett_forward.5} parent=0 // pred_check
    _
  $region7: #{lenett_forward.5} parent=0 // pred_check_branch
    %11 = sbr.rel (0) target = $region9
  $region8: #{lenett_forward.5} parent=0 // pred_region
    _
  $region9: #{lenett_forward.5} parent=0 // pred_fallthru
    _
  // Predicated region
  $region10: #{lenett_forward.5} parent=0 // pred_check
    _
  $region11: #{lenett_forward.5} parent=0 // pred_check_branch
    %13 = sbr.rel (0) target = $region13
  $region12: #{lenett_forward.5} parent=0 // pred_region
    _
  $region13: #{lenett_forward.5} parent=0 // pred_fallthru
    _
  %v14 = vld [vmem:[%s0] sm:$0xff]
  %v15 = vld [vmem:[%s1] sm:$0xff]
  %v16 = vld [vmem:[%s1 + $0x8] sm:$0xff]
  %v17 = vld [vmem:[%s1 + $0x10] sm:$0xff]
  %v18 = vld [vmem:[%s1 + $0x18] sm:$0xff]
  %v19 = vld [vmem:[%s1 + $0x20] sm:$0xff]
  %v20 = vld [vmem:[%s1 + $0x28] sm:$0xff]
  %v21 = vld [vmem:[%s1 + $0x30] sm:$0xff]
  %v22 = vld [vmem:[%s1 + $0x38] sm:$0xff]
  %v23 = vld [vmem:[%s1 + $0x40] sm:$0xff]
  %v24 = vld [vmem:[%s1 + $0x48] sm:$0xff]
  %v25 = vld [vmem:[%s1 + $0x50] sm:$0xff]
  %v26 = vld [vmem:[%s1 + $0x58] sm:$0xff]
  %v27 = vld [vmem:[%s1 + $0x60] sm:$0xff]
  %v28 = vld [vmem:[%s1 + $0x68] sm:$0xff]
  %v29 = vld [vmem:[%s1 + $0x70] sm:$0xff]
  %v30 = vld [vmem:[%s1 + $0x78] sm:$0xff]
  %v31 = vld [vmem:[%s2] sm:$0x1]
  %v33 = vlaneseq
  %v34 = vshrl.u32 %v33, 7
  %v35 = vsub.s32 0, %v34
  %v36 = vrot.slane %v31, %v35
  %38 = vmatprep.subr.mxu0 0.0
  %39 = vmatpush1.msra.mxu0 %v15
  %40 = vmatprep.subr.mxu0 0.0
  %41 = vmatpush1.msra.mxu0 %v16
  %42 = vmatprep.subr.mxu0 0.0
  %43 = vmatpush1.msra.mxu0 %v17
  %44 = vmatprep.subr.mxu0 0.0
  %45 = vmatpush1.msra.mxu0 %v18
  %46 = vmatprep.subr.mxu0 0.0
  %47 = vmatpush1.msra.mxu0 %v19
  %48 = vmatprep.subr.mxu0 0.0
  %49 = vmatpush1.msra.mxu0 %v20
  %50 = vmatprep.subr.mxu0 0.0
  %51 = vmatpush1.msra.mxu0 %v21
  %52 = vmatprep.subr.mxu0 0.0
  %53 = vmatpush1.msra.mxu0 %v22
  %54 = vmatprep.subr.mxu0 0.0
  %55 = vmatpush1.msra.mxu0 %v23
  %56 = vmatprep.subr.mxu0 0.0
  %57 = vmatpush1.msra.mxu0 %v24
  %58 = vmatprep.subr.mxu0 0.0
  %59 = vmatpush1.msra.mxu0 %v25
  %60 = vmatprep.subr.mxu0 0.0
  %61 = vmatpush1.msra.mxu0 %v26
  %62 = vmatprep.subr.mxu0 0.0
  %63 = vmatpush1.msra.mxu0 %v27
  %64 = vmatprep.subr.mxu0 0.0
  %65 = vmatpush1.msra.mxu0 %v28
  %66 = vmatprep.subr.mxu0 0.0
  %67 = vmatpush1.msra.mxu0 %v29
  %68 = vmatprep.subr.mxu0 0.0
  %69 = vmatpush1.msra.mxu0 %v30
  %70 = vmatprep.subr.mxu0 0.0
  %71 = vmatpush1.msra.mxu0 0.0
  %72 = vmatprep.subr.mxu0 0.0
  %73 = vmatpush1.msra.mxu0 0.0
  %74 = vmatprep.subr.mxu0 0.0
  %75 = vmatpush1.msra.mxu0 0.0
  %76 = vmatprep.subr.mxu0 0.0
  %77 = vmatpush1.msra.mxu0 0.0
  %78 = vmatprep.subr.mxu0 0.0
  %79 = vmatpush1.msra.mxu0 0.0
  %80 = vmatprep.subr.mxu0 0.0
  %81 = vmatpush1.msra.mxu0 0.0
  %82 = vmatprep.subr.mxu0 0.0
  %83 = vmatpush1.msra.mxu0 0.0
  %84 = vmatprep.subr.mxu0 0.0
  %85 = vmatpush1.msra.mxu0 0.0
  %86 = vmatprep.subr.mxu0 0.0
  %87 = vmatpush1.msra.mxu0 0.0
  %88 = vmatprep.subr.mxu0 0.0
  %89 = vmatpush1.msra.mxu0 0.0
  %90 = vmatprep.subr.mxu0 0.0
  %91 = vmatpush1.msra.mxu0 0.0
  %92 = vmatprep.subr.mxu0 0.0
  %93 = vmatpush1.msra.mxu0 0.0
  %94 = vmatprep.subr.mxu0 0.0
  %95 = vmatpush1.msra.mxu0 0.0
  %96 = vmatprep.subr.mxu0 0.0
  %97 = vmatpush1.msra.mxu0 0.0
  %98 = vmatprep.subr.mxu0 0.0
  %99 = vmatpush1.msra.mxu0 0.0
  %100 = vmatprep.subr.mxu0 0.0
  %101 = vmatpush1.msra.mxu0 0.0
  %102 = vmatprep.mubr.f32.mxu0 0.0
  %103 = vmatmul.mubr.f32.gmra.mrb[0].mxu0 %v14
  %v104 = vpop.f32.mrb[0].mxu0
  %v105 = vadd.f32 %v36, %v104
  %v106 = vpop.f32.mrb[0].mxu0
  %107 = vdwg.mxu0
  %108 = vst [vmem:[%s3] sm:$0xff] %v105
  // Predicated region
  $region14: #{lenett_forward.5} parent=0 // pred_check
    _
  $region15: #{lenett_forward.5} parent=0 // pred_check_branch
    %110 = sbr.rel (0) target = $region17
  $region16: #{lenett_forward.5} parent=0 // pred_region
    _
  $region17: #{lenett_forward.5} parent=0 // pred_fallthru
    _
  // Predicated region
  $region18: #{lenett_forward.5} parent=0 // pred_check
    _
  $region19: #{lenett_forward.5} parent=0 // pred_check_branch
    %112 = sbr.rel (0) target = $region21
  $region20: #{lenett_forward.5} parent=0 // pred_region
    _
  $region21: #{lenett_forward.5} parent=0 // pred_fallthru
    _

</llo_original>
